<compile_context>
chip_gen: v6e
topology: v6e:2x2x1
jax: 0.10.0
libtpu: 0.0.40
codegen_flags: <defaults>
</compile_context>

<pallas_src>
import jax
import jax.numpy as jnp
from jax.experimental import pallas as pl
from jax.experimental.pallas import tpu as pltpu

# ---- synthetic "roberta" config (small but lane-dense shapes) ----
VOCAB = 100
HIDDEN = 128                 # multiple of 128 -> lane-dense vregs / unmasked stores
N_LAYERS = 2
N_HEADS = 4
HEAD_DIM = HIDDEN // N_HEADS
INTERMEDIATE = 256
MAX_POS = 20
TYPE_VOCAB = 2
PAD_IDX = 1                  # RoBERTa padding idx (positions are offset by it)
LN_EPS = 1e-5


# ---------------------------------------------------------------- helpers
def _layer_norm(x, g, b):
    mu = jnp.mean(x, axis=-1, keepdims=True)
    var = jnp.mean(jnp.square(x - mu), axis=-1, keepdims=True)
    return (x - mu) * jax.lax.rsqrt(var + LN_EPS) * g + b


# ---------------------------------------------------------------- fused encoder + pooler kernel
# grid = (G, L).  The activation lives in a VMEM scratch that is (re)initialized at layer 0
# of each group and carried across the layer axis; only the pooled (B, 1, H) features are
# written to HBM.
def _encoder_pooler_kernel(emb_ref, neg_ref, gvec_ref,
                           wqkv_ref, bqkv_ref, wo_ref,
                           wi_ref, bi_ref, wf_ref, lvec_ref, pw_ref,
                           feat_ref, act_ref):
    layer = pl.program_id(1)
    n_layers = pl.num_programs(1)
    Bg, S, H = act_ref.shape
    scale = 1.0 / (HEAD_DIM ** 0.5)

    # ---- layer 0: fused embedding LayerNorm into the resident VMEM activation
    @pl.when(layer == 0)
    def _():
        act_ref[...] = _layer_norm(emb_ref[...],
                                   gvec_ref[0:1, :], gvec_ref[1:2, :])

    x3 = act_ref[...]                               # (Bg, S, H) f32
    x = x3.reshape(Bg * S, H)                       # flatten batch for dense matmuls
    x_bf = x.astype(jnp.bfloat16)

    lvec = lvec_ref[0]                              # (6, H): bo, ln1g, ln1b, bf, ln2g, ln2b
    bo = lvec[0:1, :]
    ln1g = lvec[1:2, :]
    ln1b = lvec[2:3, :]
    bf2 = lvec[3:4, :]
    ln2g = lvec[4:5, :]
    ln2b = lvec[5:6, :]

    # ---- fused QKV projection: one (Bg*S, H) x (H, 3H) MXU matmul
    qkv = jnp.dot(x_bf, wqkv_ref[0],
                  preferred_element_type=jnp.float32) + bqkv_ref[0]
    q = qkv[:, 0:H] * scale                         # fold 1/sqrt(D) once per layer
    k = qkv[:, H:2 * H]
    v = qkv[:, 2 * H:3 * H]

    # ---- attention: per batch row (static), per head (static, unrolled).
    # Head contexts are concatenated into a lane-aligned (S, H) buffer so the output
    # projection is a single K=H matmul instead of 4 K=32 matmuls.
    ctx_rows = []
    for b in range(Bg):
        negb = neg_ref[b]                           # (1, S) additive key mask
        qb = q[b * S:(b + 1) * S, :]
        kb = k[b * S:(b + 1) * S, :]
        vb = v[b * S:(b + 1) * S, :]
        heads = []
        for h in range(N_HEADS):
            sl = slice(h * HEAD_DIM, (h + 1) * HEAD_DIM)
            s = jax.lax.dot_general(qb[:, sl].astype(jnp.bfloat16),
                                    kb[:, sl].astype(jnp.bfloat16),
                                    (((1,), (1,)), ((), ())),
                                    preferred_element_type=jnp.float32)   # (S, S)
            s = s + negb
            s = s - jnp.max(s, axis=-1, keepdims=True)
            p = jnp.exp(s)
            p = p * pl.reciprocal(jnp.sum(p, axis=-1, keepdims=True), approx=True)
            heads.append(jnp.dot(p.astype(jnp.bfloat16),
                                 vb[:, sl].astype(jnp.bfloat16),
                                 preferred_element_type=jnp.float32))     # (S, D)
        ctx_rows.append(jnp.concatenate(heads, axis=1))                   # (S, H)
    ctx = jnp.concatenate(ctx_rows, axis=0) if Bg > 1 else ctx_rows[0]    # (Bg*S, H)

    attn = jnp.dot(ctx.astype(jnp.bfloat16), wo_ref[0],
                   preferred_element_type=jnp.float32) + bo
    h1 = _layer_norm(x + attn, ln1g, ln1b)

    ff = jnp.dot(h1.astype(jnp.bfloat16), wi_ref[0],
                 preferred_element_type=jnp.float32) + bi_ref[0]
    # TODO(synk): HF RoBERTa gelu is erf-based; tanh approximation used (EUP-friendly).
    ff = jax.nn.gelu(ff, approximate=True)
    ff = jnp.dot(ff.astype(jnp.bfloat16), wf_ref[0],
                 preferred_element_type=jnp.float32) + bf2

    y = _layer_norm(h1 + ff, ln2g, ln2b)
    act_ref[...] = y.reshape(Bg, S, H)              # carry to the next layer step

    # ---- fused pooler on the final layer: tanh(CLS @ Wpool + b)
    @pl.when(layer == n_layers - 1)
    def _():
        if Bg > 1:
            cls = jnp.concatenate([y[b * S:b * S + 1, :] for b in range(Bg)], axis=0)
        else:
            cls = y[0:1, :]                         # (Bg, H)
        pooled = jnp.tanh(
            jnp.dot(cls.astype(jnp.bfloat16), pw_ref[...],
                    preferred_element_type=jnp.float32) + gvec_ref[2:3, :])
        feat_ref[...] = pooled.reshape(Bg, 1, H)


def encoder_pooler_pallas(emb, neg_mask, gvec, pool_w, layer_params):
    B, S, H = emb.shape
    wqkv, bqkv, wo, wi, bi, wf, lvec = layer_params
    L = wqkv.shape[0]
    I = wi.shape[2]

    # Core-group axis: keeps a "parallel" grid axis for v7x's 2 TensorCores.
    G = 2 if (B >= 2 and B % 2 == 0) else 1
    Bg = B // G

    def lw(shape2d):
        # one layer slab per grid step along the layer axis
        return pl.BlockSpec((1,) + shape2d, lambda g, l: (l, 0, 0))

    in_specs = [
        pl.BlockSpec((Bg, S, H), lambda g, l: (g, 0, 0)),   # embeddings (fetched once per g)
        pl.BlockSpec((Bg, 1, S), lambda g, l: (g, 0, 0)),   # additive key mask
        pl.BlockSpec((3, H), lambda g, l: (0, 0)),          # [emb_ln_g, emb_ln_b, pool_b]
        lw((H, 3 * H)),                                     # Wqkv  (fused)
        lw((1, 3 * H)),                                     # bqkv  (fused)
        lw((H, H)),                                         # Wo
        lw((H, I)),                                         # Wi
        lw((1, I)),                                         # bi
        lw((I, H)),                                         # Wf
        lw((6, H)),                                         # [bo, ln1g, ln1b, bf, ln2g, ln2b]
        pl.BlockSpec((H, H), lambda g, l: (0, 0)),          # pooler weight
    ]

    feats = pl.pallas_call(
        _encoder_pooler_kernel,
        out_shape=jax.ShapeDtypeStruct((B, 1, H), jnp.float32),
        grid=(G, L),
        in_specs=in_specs,
        out_specs=pl.BlockSpec((Bg, 1, H), lambda g, l: (g, 0, 0)),
        scratch_shapes=[pltpu.VMEM((Bg, S, H), jnp.float32)],
        compiler_params=pltpu.CompilerParams(
            dimension_semantics=("parallel", "arbitrary")),
    )(emb, neg_mask, gvec, wqkv, bqkv, wo, wi, bi, wf, lvec, pool_w)
    return feats[:, 0, :]                                   # (B, H)


# ---------------------------------------------------------------- parameters (deterministic synthetic init)
def init_params(key):
    keys = iter(jax.random.split(key, 64))

    def n(shape, dtype=jnp.float32):
        return (0.02 * jax.random.normal(next(keys), shape, jnp.float32)).astype(dtype)

    ones = lambda s: jnp.ones(s, jnp.float32)
    zeros = lambda s: jnp.zeros(s, jnp.float32)

    params = {
        "word_emb": n((VOCAB, HIDDEN)),
        "pos_emb": n((MAX_POS, HIDDEN)),
        "type_emb": n((TYPE_VOCAB, HIDDEN)),
        # global vector slab rows: [emb_ln_gamma, emb_ln_beta, pooler_bias]
        "gvec": jnp.concatenate(
            [ones((1, HIDDEN)), zeros((1, HIDDEN)), zeros((1, HIDDEN))], axis=0),
        "pool_w": n((HIDDEN, HIDDEN), jnp.bfloat16),
    }

    wqkv, bqkv, wo, wi, bi, wf, lvec = [], [], [], [], [], [], []
    for _ in range(N_LAYERS):
        wq, wk, wv = n((HIDDEN, HIDDEN)), n((HIDDEN, HIDDEN)), n((HIDDEN, HIDDEN))
        wqkv.append(jnp.concatenate([wq, wk, wv], axis=1).astype(jnp.bfloat16))  # (H, 3H)
        bqkv.append(zeros((1, 3 * HIDDEN)))
        wo.append(n((HIDDEN, HIDDEN), jnp.bfloat16))
        wi.append(n((HIDDEN, INTERMEDIATE), jnp.bfloat16))
        bi.append(zeros((1, INTERMEDIATE)))
        wf.append(n((INTERMEDIATE, HIDDEN), jnp.bfloat16))
        # per-layer vector slab rows: [bo, ln1_g, ln1_b, bf, ln2_g, ln2_b]
        lvec.append(jnp.concatenate(
            [zeros((1, HIDDEN)), ones((1, HIDDEN)), zeros((1, HIDDEN)),
             zeros((1, HIDDEN)), ones((1, HIDDEN)), zeros((1, HIDDEN))], axis=0))

    params["layers"] = (
        jnp.stack(wqkv),   # (L, H, 3H) bf16
        jnp.stack(bqkv),   # (L, 1, 3H) f32
        jnp.stack(wo),     # (L, H, H)  bf16
        jnp.stack(wi),     # (L, H, I)  bf16
        jnp.stack(bi),     # (L, 1, I)  f32
        jnp.stack(wf),     # (L, I, H)  bf16
        jnp.stack(lvec),   # (L, 6, H)  f32
    )
    return params


# ---------------------------------------------------------------- full forward (matches RoBerta.forward)
def roberta_forward(params, input_ids, attention_mask, token_type_ids):
    mask_f = attention_mask.astype(jnp.float32)
    # RoBERTa-style position ids: non-pad positions get cumulative index offset by padding_idx.
    position_ids = jnp.cumsum(attention_mask, axis=1) * attention_mask + PAD_IDX

    # embedding gathers are glue (plain JAX); everything downstream is one Pallas kernel.
    emb = (jnp.take(params["word_emb"], input_ids, axis=0)
           + jnp.take(params["pos_emb"], position_ids, axis=0)
           + jnp.take(params["type_emb"], token_type_ids, axis=0))

    # layer-invariant additive key mask, hoisted out of the kernel
    neg_mask = ((1.0 - mask_f) * -1e9)[:, None, :]            # (B, 1, S)

    # pooler_output == "features" returned by RoBerta.forward (with_hidden_states=False)
    return encoder_pooler_pallas(emb, neg_mask, params["gvec"],
                                 params["pool_w"], params["layers"])


if __name__ == "__main__":
    key = jax.random.PRNGKey(0)
    pkey, dkey = jax.random.split(key)
    params = init_params(pkey)

    B, S = 2, 8
    input_ids = jax.random.randint(dkey, (B, S), 2, VOCAB, dtype=jnp.int32)
    attention_mask = jnp.ones((B, S), dtype=jnp.int32).at[1, 6:].set(0)
    input_ids = jnp.where(attention_mask == 1, input_ids, PAD_IDX)
    token_type_ids = jnp.zeros((B, S), dtype=jnp.int32)

    features = roberta_forward(params, input_ids, attention_mask, token_type_ids)
    jax.block_until_ready(features)
    assert features.shape == (B, HIDDEN) and features.dtype == jnp.float32
    print("KERNEL_OK")
</pallas_src>

<mosaic_0001>
module attributes {stable_mosaic.version = 11 : i64} {
  func.func @_encoder_pooler_kernel(%arg0: i32, %arg1: i32, %arg2: memref<1x8x128xf32, #tpu.memory_space<vmem>>, %arg3: memref<1x1x8xf32, #tpu.memory_space<vmem>>, %arg4: memref<3x128xf32, #tpu.memory_space<vmem>>, %arg5: memref<1x128x384xbf16, #tpu.memory_space<vmem>>, %arg6: memref<1x1x384xf32, #tpu.memory_space<vmem>>, %arg7: memref<1x128x128xbf16, #tpu.memory_space<vmem>>, %arg8: memref<1x128x256xbf16, #tpu.memory_space<vmem>>, %arg9: memref<1x1x256xf32, #tpu.memory_space<vmem>>, %arg10: memref<1x256x128xbf16, #tpu.memory_space<vmem>>, %arg11: memref<1x6x128xf32, #tpu.memory_space<vmem>>, %arg12: memref<128x128xbf16, #tpu.memory_space<vmem>>, %arg13: memref<1x1x128xf32, #tpu.memory_space<vmem>>, %arg14: memref<1x8x128xf32, #tpu.memory_space<vmem>>) attributes {dimension_semantics = [#tpu.dimension_semantics<parallel>, #tpu.dimension_semantics<arbitrary>], iteration_bounds = array<i64: 2, 2>, scalar_prefetch = 0 : i64, scratch_operands = 1 : i64, tpu.core_type = #tpu.core_type<tc>, window_params = [{transform_indices = @transform_0, window_bounds = array<i64: 1, 8, 128>}, {transform_indices = @transform_1, window_bounds = array<i64: 1, 1, 8>}, {pipeline_mode = #tpu.pipeline_mode<synchronous>, transform_indices = @transform_2, window_bounds = array<i64: 3, 128>}, {transform_indices = @transform_3, window_bounds = array<i64: 1, 128, 384>}, {transform_indices = @transform_4, window_bounds = array<i64: 1, 1, 384>}, {transform_indices = @transform_5, window_bounds = array<i64: 1, 128, 128>}, {transform_indices = @transform_6, window_bounds = array<i64: 1, 128, 256>}, {transform_indices = @transform_7, window_bounds = array<i64: 1, 1, 256>}, {transform_indices = @transform_8, window_bounds = array<i64: 1, 256, 128>}, {transform_indices = @transform_9, window_bounds = array<i64: 1, 6, 128>}, {pipeline_mode = #tpu.pipeline_mode<synchronous>, transform_indices = @transform_10, window_bounds = array<i64: 128, 128>}, {transform_indices = @transform_11, window_bounds = array<i64: 1, 1, 128>}]} {
    %c0_i32 = arith.constant 0 : i32
    %0 = arith.cmpi eq, %arg1, %c0_i32 : i32
    %1 = arith.extui %0 : i1 to i32
    %c0_i32_0 = arith.constant 0 : i32
    %2 = arith.cmpi ne, %1, %c0_i32_0 : i32
    scf.if %2 {
      %c0_65 = arith.constant 0 : index
      %c0_66 = arith.constant 0 : index
      %c0_67 = arith.constant 0 : index
      %197 = vector.load %arg2[%c0_65, %c0_66, %c0_67] : memref<1x8x128xf32, #tpu.memory_space<vmem>>, vector<1x8x128xf32>
      %c0_68 = arith.constant 0 : index
      %c0_69 = arith.constant 0 : index
      %198 = vector.load %arg4[%c0_68, %c0_69] : memref<3x128xf32, #tpu.memory_space<vmem>>, vector<1x128xf32>
      %c1 = arith.constant 1 : index
      %c0_70 = arith.constant 0 : index
      %199 = vector.load %arg4[%c1, %c0_70] : memref<3x128xf32, #tpu.memory_space<vmem>>, vector<1x128xf32>
      %cst_71 = arith.constant dense<0.000000e+00> : vector<1x8xf32>
      %200 = vector.multi_reduction <add>, %197, %cst_71 [2] : vector<1x8x128xf32> to vector<1x8xf32>
      %201 = vector.shape_cast %200 : vector<1x8xf32> to vector<1x8x1xf32>
      %cst_72 = arith.constant 1.280000e+02 : f32
      %202 = vector.broadcast %cst_72 : f32 to vector<1x8x1xf32>
      %203 = arith.divf %201, %202 : vector<1x8x1xf32>
      %204 = vector.broadcast %203 : vector<1x8x1xf32> to vector<1x8x128xf32>
      %205 = arith.subf %197, %204 : vector<1x8x128xf32>
      %206 = arith.mulf %205, %205 : vector<1x8x128xf32>
      %cst_73 = arith.constant dense<0.000000e+00> : vector<1x8xf32>
      %207 = vector.multi_reduction <add>, %206, %cst_73 [2] : vector<1x8x128xf32> to vector<1x8xf32>
      %208 = vector.shape_cast %207 : vector<1x8xf32> to vector<1x8x1xf32>
      %cst_74 = arith.constant 1.280000e+02 : f32
      %209 = vector.broadcast %cst_74 : f32 to vector<1x8x1xf32>
      %210 = arith.divf %208, %209 : vector<1x8x1xf32>
      %211 = vector.broadcast %203 : vector<1x8x1xf32> to vector<1x8x128xf32>
      %212 = arith.subf %197, %211 : vector<1x8x128xf32>
      %cst_75 = arith.constant 9.99999974E-6 : f32
      %213 = vector.broadcast %cst_75 : f32 to vector<1x8x1xf32>
      %214 = arith.addf %210, %213 : vector<1x8x1xf32>
      %215 = math.rsqrt %214 : vector<1x8x1xf32>
      %216 = vector.broadcast %215 : vector<1x8x1xf32> to vector<1x8x128xf32>
      %217 = arith.mulf %212, %216 : vector<1x8x128xf32>
      %218 = vector.shape_cast %198 : vector<1x128xf32> to vector<1x1x128xf32>
      %219 = vector.broadcast %218 : vector<1x1x128xf32> to vector<1x8x128xf32>
      %220 = arith.mulf %217, %219 : vector<1x8x128xf32>
      %221 = vector.shape_cast %199 : vector<1x128xf32> to vector<1x1x128xf32>
      %222 = vector.broadcast %221 : vector<1x1x128xf32> to vector<1x8x128xf32>
      %223 = arith.addf %220, %222 : vector<1x8x128xf32>
      %c0_76 = arith.constant 0 : index
      %c0_77 = arith.constant 0 : index
      %c0_78 = arith.constant 0 : index
      %224 = vector.load %arg14[%c0_76, %c0_77, %c0_78] : memref<1x8x128xf32, #tpu.memory_space<vmem>>, vector<1x8x128xf32>
      tpu.vector_store %arg14[%c0_76, %c0_77, %c0_78], %223 {strides = array<i32>} : memref<1x8x128xf32, #tpu.memory_space<vmem>>, vector<1x8x128xf32>,
    } else {
    }
    %c0 = arith.constant 0 : index
    %c0_1 = arith.constant 0 : index
    %c0_2 = arith.constant 0 : index
    %3 = vector.load %arg14[%c0, %c0_1, %c0_2] : memref<1x8x128xf32, #tpu.memory_space<vmem>>, vector<1x8x128xf32>
    %4 = vector.shape_cast %3 : vector<1x8x128xf32> to vector<8x128xf32>
    %5 = arith.truncf %4 : vector<8x128xf32> to vector<8x128xbf16>
    %c0_3 = arith.constant 0 : index
    %c0_4 = arith.constant 0 : index
    %c0_5 = arith.constant 0 : index
    %6 = vector.load %arg11[%c0_3, %c0_4, %c0_5] : memref<1x6x128xf32, #tpu.memory_space<vmem>>, vector<1x6x128xf32>
    %7 = vector.shape_cast %6 : vector<1x6x128xf32> to vector<6x128xf32>
    %8 = vector.extract_strided_slice %7 {offsets = [0, 0], sizes = [1, 128], strides = [1, 1]} : vector<6x128xf32> to vector<1x128xf32>
    %9 = vector.extract_strided_slice %7 {offsets = [1, 0], sizes = [1, 128], strides = [1, 1]} : vector<6x128xf32> to vector<1x128xf32>
    %10 = vector.extract_strided_slice %7 {offsets = [2, 0], sizes = [1, 128], strides = [1, 1]} : vector<6x128xf32> to vector<1x128xf32>
    %11 = vector.extract_strided_slice %7 {offsets = [3, 0], sizes = [1, 128], strides = [1, 1]} : vector<6x128xf32> to vector<1x128xf32>
    %12 = vector.extract_strided_slice %7 {offsets = [4, 0], sizes = [1, 128], strides = [1, 1]} : vector<6x128xf32> to vector<1x128xf32>
    %13 = vector.extract_strided_slice %7 {offsets = [5, 0], sizes = [1, 128], strides = [1, 1]} : vector<6x128xf32> to vector<1x128xf32>
    %c0_6 = arith.constant 0 : index
    %c0_7 = arith.constant 0 : index
    %c0_8 = arith.constant 0 : index
    %14 = vector.load %arg5[%c0_6, %c0_7, %c0_8] : memref<1x128x384xbf16, #tpu.memory_space<vmem>>, vector<1x128x384xbf16>
    %15 = vector.shape_cast %14 : vector<1x128x384xbf16> to vector<128x384xbf16>
    %cst = arith.constant dense<0.000000e+00> : vector<8x384xf32>
    %16 = tpu.matmul %5, %15, %cst {dimension_numbers = #tpu.dot_dimension_numbers<[1], [0], [0], [1], [0, 0, 1, 1], [], []>} : vector<8x128xbf16>, vector<128x384xbf16>, vector<8x384xf32> -> vector<8x384xf32>
    %c0_9 = arith.constant 0 : index
    %c0_10 = arith.constant 0 : index
    %c0_11 = arith.constant 0 : index
    %17 = vector.load %arg6[%c0_9, %c0_10, %c0_11] : memref<1x1x384xf32, #tpu.memory_space<vmem>>, vector<1x1x384xf32>
    %18 = vector.shape_cast %17 : vector<1x1x384xf32> to vector<1x384xf32>
    %19 = vector.broadcast %18 : vector<1x384xf32> to vector<8x384xf32>
    %20 = arith.addf %16, %19 : vector<8x384xf32>
    %21 = vector.extract_strided_slice %20 {offsets = [0, 0], sizes = [8, 128], strides = [1, 1]} : vector<8x384xf32> to vector<8x128xf32>
    %cst_12 = arith.constant 0.176776692 : f32
    %22 = vector.broadcast %cst_12 : f32 to vector<8x128xf32>
    %23 = arith.mulf %21, %22 : vector<8x128xf32>
    %24 = vector.extract_strided_slice %20 {offsets = [0, 128], sizes = [8, 128], strides = [1, 1]} : vector<8x384xf32> to vector<8x128xf32>
    %25 = vector.extract_strided_slice %20 {offsets = [0, 256], sizes = [8, 128], strides = [1, 1]} : vector<8x384xf32> to vector<8x128xf32>
    %c0_13 = arith.constant 0 : index
    %c0_14 = arith.constant 0 : index
    %c0_15 = arith.constant 0 : index
    %26 = vector.load %arg3[%c0_13, %c0_14, %c0_15] : memref<1x1x8xf32, #tpu.memory_space<vmem>>, vector<1x1x8xf32>
    %27 = vector.shape_cast %26 : vector<1x1x8xf32> to vector<1x8xf32>
    %28 = vector.extract_strided_slice %23 {offsets = [0, 0], sizes = [8, 32], strides = [1, 1]} : vector<8x128xf32> to vector<8x32xf32>
    %29 = arith.truncf %28 : vector<8x32xf32> to vector<8x32xbf16>
    %30 = vector.extract_strided_slice %24 {offsets = [0, 0], sizes = [8, 32], strides = [1, 1]} : vector<8x128xf32> to vector<8x32xf32>
    %31 = arith.truncf %30 : vector<8x32xf32> to vector<8x32xbf16>
    %cst_16 = arith.constant dense<0.000000e+00> : vector<8x8xf32>
    %32 = tpu.matmul %29, %31, %cst_16 {dimension_numbers = #tpu.dot_dimension_numbers<[1], [1], [0], [0], [0, 0, 1, 0], [], []>} : vector<8x32xbf16>, vector<8x32xbf16>, vector<8x8xf32> -> vector<8x8xf32>
    %33 = vector.broadcast %27 : vector<1x8xf32> to vector<8x8xf32>
    %34 = arith.addf %32, %33 : vector<8x8xf32>
    %cst_17 = arith.constant dense<0xFF800000> : vector<8xf32>
    %35 = vector.multi_reduction <maximumf>, %34, %cst_17 [1] : vector<8x8xf32> to vector<8xf32>
    %36 = vector.shape_cast %35 : vector<8xf32> to vector<8x1xf32>
    %37 = vector.broadcast %36 : vector<8x1xf32> to vector<8x8xf32>
    %38 = arith.subf %34, %37 : vector<8x8xf32>
    %39 = math.exp %38 : vector<8x8xf32>
    %cst_18 = arith.constant dense<0.000000e+00> : vector<8xf32>
    %40 = vector.multi_reduction <add>, %39, %cst_18 [1] : vector<8x8xf32> to vector<8xf32>
    %41 = vector.shape_cast %40 : vector<8xf32> to vector<8x1xf32>
    %42 = tpu.reciprocal %41 {approx = true} : vector<8x1xf32> -> vector<8x1xf32>
    %43 = vector.broadcast %42 : vector<8x1xf32> to vector<8x8xf32>
    %44 = arith.mulf %39, %43 : vector<8x8xf32>
    %45 = arith.truncf %44 : vector<8x8xf32> to vector<8x8xbf16>
    %46 = vector.extract_strided_slice %25 {offsets = [0, 0], sizes = [8, 32], strides = [1, 1]} : vector<8x128xf32> to vector<8x32xf32>
    %47 = arith.truncf %46 : vector<8x32xf32> to vector<8x32xbf16>
    %cst_19 = arith.constant dense<0.000000e+00> : vector<8x32xf32>
    %48 = tpu.matmul %45, %47, %cst_19 {dimension_numbers = #tpu.dot_dimension_numbers<[1], [0], [0], [1], [0, 0, 1, 1], [], []>} : vector<8x8xbf16>, vector<8x32xbf16>, vector<8x32xf32> -> vector<8x32xf32>
    %49 = vector.extract_strided_slice %23 {offsets = [0, 32], sizes = [8, 32], strides = [1, 1]} : vector<8x128xf32> to vector<8x32xf32>
    %50 = arith.truncf %49 : vector<8x32xf32> to vector<8x32xbf16>
    %51 = vector.extract_strided_slice %24 {offsets = [0, 32], sizes = [8, 32], strides = [1, 1]} : vector<8x128xf32> to vector<8x32xf32>
    %52 = arith.truncf %51 : vector<8x32xf32> to vector<8x32xbf16>
    %cst_20 = arith.constant dense<0.000000e+00> : vector<8x8xf32>
    %53 = tpu.matmul %50, %52, %cst_20 {dimension_numbers = #tpu.dot_dimension_numbers<[1], [1], [0], [0], [0, 0, 1, 0], [], []>} : vector<8x32xbf16>, vector<8x32xbf16>, vector<8x8xf32> -> vector<8x8xf32>
    %54 = vector.broadcast %27 : vector<1x8xf32> to vector<8x8xf32>
    %55 = arith.addf %53, %54 : vector<8x8xf32>
    %cst_21 = arith.constant dense<0xFF800000> : vector<8xf32>
    %56 = vector.multi_reduction <maximumf>, %55, %cst_21 [1] : vector<8x8xf32> to vector<8xf32>
    %57 = vector.shape_cast %56 : vector<8xf32> to vector<8x1xf32>
    %58 = vector.broadcast %57 : vector<8x1xf32> to vector<8x8xf32>
    %59 = arith.subf %55, %58 : vector<8x8xf32>
    %60 = math.exp %59 : vector<8x8xf32>
    %cst_22 = arith.constant dense<0.000000e+00> : vector<8xf32>
    %61 = vector.multi_reduction <add>, %60, %cst_22 [1] : vector<8x8xf32> to vector<8xf32>
    %62 = vector.shape_cast %61 : vector<8xf32> to vector<8x1xf32>
    %63 = tpu.reciprocal %62 {approx = true} : vector<8x1xf32> -> vector<8x1xf32>
    %64 = vector.broadcast %63 : vector<8x1xf32> to vector<8x8xf32>
    %65 = arith.mulf %60, %64 : vector<8x8xf32>
    %66 = arith.truncf %65 : vector<8x8xf32> to vector<8x8xbf16>
    %67 = vector.extract_strided_slice %25 {offsets = [0, 32], sizes = [8, 32], strides = [1, 1]} : vector<8x128xf32> to vector<8x32xf32>
    %68 = arith.truncf %67 : vector<8x32xf32> to vector<8x32xbf16>
    %cst_23 = arith.constant dense<0.000000e+00> : vector<8x32xf32>
    %69 = tpu.matmul %66, %68, %cst_23 {dimension_numbers = #tpu.dot_dimension_numbers<[1], [0], [0], [1], [0, 0, 1, 1], [], []>} : vector<8x8xbf16>, vector<8x32xbf16>, vector<8x32xf32> -> vector<8x32xf32>
    %70 = vector.extract_strided_slice %23 {offsets = [0, 64], sizes = [8, 32], strides = [1, 1]} : vector<8x128xf32> to vector<8x32xf32>
    %71 = arith.truncf %70 : vector<8x32xf32> to vector<8x32xbf16>
    %72 = vector.extract_strided_slice %24 {offsets = [0, 64], sizes = [8, 32], strides = [1, 1]} : vector<8x128xf32> to vector<8x32xf32>
    %73 = arith.truncf %72 : vector<8x32xf32> to vector<8x32xbf16>
    %cst_24 = arith.constant dense<0.000000e+00> : vector<8x8xf32>
    %74 = tpu.matmul %71, %73, %cst_24 {dimension_numbers = #tpu.dot_dimension_numbers<[1], [1], [0], [0], [0, 0, 1, 0], [], []>} : vector<8x32xbf16>, vector<8x32xbf16>, vector<8x8xf32> -> vector<8x8xf32>
    %75 = vector.broadcast %27 : vector<1x8xf32> to vector<8x8xf32>
    %76 = arith.addf %74, %75 : vector<8x8xf32>
    %cst_25 = arith.constant dense<0xFF800000> : vector<8xf32>
    %77 = vector.multi_reduction <maximumf>, %76, %cst_25 [1] : vector<8x8xf32> to vector<8xf32>
    %78 = vector.shape_cast %77 : vector<8xf32> to vector<8x1xf32>
    %79 = vector.broadcast %78 : vector<8x1xf32> to vector<8x8xf32>
    %80 = arith.subf %76, %79 : vector<8x8xf32>
    %81 = math.exp %80 : vector<8x8xf32>
    %cst_26 = arith.constant dense<0.000000e+00> : vector<8xf32>
    %82 = vector.multi_reduction <add>, %81, %cst_26 [1] : vector<8x8xf32> to vector<8xf32>
    %83 = vector.shape_cast %82 : vector<8xf32> to vector<8x1xf32>
    %84 = tpu.reciprocal %83 {approx = true} : vector<8x1xf32> -> vector<8x1xf32>
    %85 = vector.broadcast %84 : vector<8x1xf32> to vector<8x8xf32>
    %86 = arith.mulf %81, %85 : vector<8x8xf32>
    %87 = arith.truncf %86 : vector<8x8xf32> to vector<8x8xbf16>
    %88 = vector.extract_strided_slice %25 {offsets = [0, 64], sizes = [8, 32], strides = [1, 1]} : vector<8x128xf32> to vector<8x32xf32>
    %89 = arith.truncf %88 : vector<8x32xf32> to vector<8x32xbf16>
    %cst_27 = arith.constant dense<0.000000e+00> : vector<8x32xf32>
    %90 = tpu.matmul %87, %89, %cst_27 {dimension_numbers = #tpu.dot_dimension_numbers<[1], [0], [0], [1], [0, 0, 1, 1], [], []>} : vector<8x8xbf16>, vector<8x32xbf16>, vector<8x32xf32> -> vector<8x32xf32>
    %91 = vector.extract_strided_slice %23 {offsets = [0, 96], sizes = [8, 32], strides = [1, 1]} : vector<8x128xf32> to vector<8x32xf32>
    %92 = arith.truncf %91 : vector<8x32xf32> to vector<8x32xbf16>
    %93 = vector.extract_strided_slice %24 {offsets = [0, 96], sizes = [8, 32], strides = [1, 1]} : vector<8x128xf32> to vector<8x32xf32>
    %94 = arith.truncf %93 : vector<8x32xf32> to vector<8x32xbf16>
    %cst_28 = arith.constant dense<0.000000e+00> : vector<8x8xf32>
    %95 = tpu.matmul %92, %94, %cst_28 {dimension_numbers = #tpu.dot_dimension_numbers<[1], [1], [0], [0], [0, 0, 1, 0], [], []>} : vector<8x32xbf16>, vector<8x32xbf16>, vector<8x8xf32> -> vector<8x8xf32>
    %96 = vector.broadcast %27 : vector<1x8xf32> to vector<8x8xf32>
    %97 = arith.addf %95, %96 : vector<8x8xf32>
    %cst_29 = arith.constant dense<0xFF800000> : vector<8xf32>
    %98 = vector.multi_reduction <maximumf>, %97, %cst_29 [1] : vector<8x8xf32> to vector<8xf32>
    %99 = vector.shape_cast %98 : vector<8xf32> to vector<8x1xf32>
    %100 = vector.broadcast %99 : vector<8x1xf32> to vector<8x8xf32>
    %101 = arith.subf %97, %100 : vector<8x8xf32>
    %102 = math.exp %101 : vector<8x8xf32>
    %cst_30 = arith.constant dense<0.000000e+00> : vector<8xf32>
    %103 = vector.multi_reduction <add>, %102, %cst_30 [1] : vector<8x8xf32> to vector<8xf32>
    %104 = vector.shape_cast %103 : vector<8xf32> to vector<8x1xf32>
    %105 = tpu.reciprocal %104 {approx = true} : vector<8x1xf32> -> vector<8x1xf32>
    %106 = vector.broadcast %105 : vector<8x1xf32> to vector<8x8xf32>
    %107 = arith.mulf %102, %106 : vector<8x8xf32>
    %108 = arith.truncf %107 : vector<8x8xf32> to vector<8x8xbf16>
    %109 = vector.extract_strided_slice %25 {offsets = [0, 96], sizes = [8, 32], strides = [1, 1]} : vector<8x128xf32> to vector<8x32xf32>
    %110 = arith.truncf %109 : vector<8x32xf32> to vector<8x32xbf16>
    %cst_31 = arith.constant dense<0.000000e+00> : vector<8x32xf32>
    %111 = tpu.matmul %108, %110, %cst_31 {dimension_numbers = #tpu.dot_dimension_numbers<[1], [0], [0], [1], [0, 0, 1, 1], [], []>} : vector<8x8xbf16>, vector<8x32xbf16>, vector<8x32xf32> -> vector<8x32xf32>
    %112 = tpu.concatenate %48, %69, %90, %111 in 1 : vector<8x32xf32>, vector<8x32xf32>, vector<8x32xf32>, vector<8x32xf32> -> vector<8x128xf32>
    %113 = arith.truncf %112 : vector<8x128xf32> to vector<8x128xbf16>
    %c0_32 = arith.constant 0 : index
    %c0_33 = arith.constant 0 : index
    %c0_34 = arith.constant 0 : index
    %114 = vector.load %arg7[%c0_32, %c0_33, %c0_34] : memref<1x128x128xbf16, #tpu.memory_space<vmem>>, vector<1x128x128xbf16>
    %115 = vector.shape_cast %114 : vector<1x128x128xbf16> to vector<128x128xbf16>
    %cst_35 = arith.constant dense<0.000000e+00> : vector<8x128xf32>
    %116 = tpu.matmul %113, %115, %cst_35 {dimension_numbers = #tpu.dot_dimension_numbers<[1], [0], [0], [1], [0, 0, 1, 1], [], []>} : vector<8x128xbf16>, vector<128x128xbf16>, vector<8x128xf32> -> vector<8x128xf32>
    %117 = vector.broadcast %8 : vector<1x128xf32> to vector<8x128xf32>
    %118 = arith.addf %116, %117 : vector<8x128xf32>
    %119 = arith.addf %4, %118 : vector<8x128xf32>
    %cst_36 = arith.constant dense<0.000000e+00> : vector<8xf32>
    %120 = vector.multi_reduction <add>, %119, %cst_36 [1] : vector<8x128xf32> to vector<8xf32>
    %121 = vector.shape_cast %120 : vector<8xf32> to vector<8x1xf32>
    %cst_37 = arith.constant 1.280000e+02 : f32
    %122 = vector.broadcast %cst_37 : f32 to vector<8x1xf32>
    %123 = arith.divf %121, %122 : vector<8x1xf32>
    %124 = vector.broadcast %123 : vector<8x1xf32> to vector<8x128xf32>
    %125 = arith.subf %119, %124 : vector<8x128xf32>
    %126 = arith.mulf %125, %125 : vector<8x128xf32>
    %cst_38 = arith.constant dense<0.000000e+00> : vector<8xf32>
    %127 = vector.multi_reduction <add>, %126, %cst_38 [1] : vector<8x128xf32> to vector<8xf32>
    %128 = vector.shape_cast %127 : vector<8xf32> to vector<8x1xf32>
    %cst_39 = arith.constant 1.280000e+02 : f32
    %129 = vector.broadcast %cst_39 : f32 to vector<8x1xf32>
    %130 = arith.divf %128, %129 : vector<8x1xf32>
    %131 = vector.broadcast %123 : vector<8x1xf32> to vector<8x128xf32>
    %132 = arith.subf %119, %131 : vector<8x128xf32>
    %cst_40 = arith.constant 9.99999974E-6 : f32
    %133 = vector.broadcast %cst_40 : f32 to vector<8x1xf32>
    %134 = arith.addf %130, %133 : vector<8x1xf32>
    %135 = math.rsqrt %134 : vector<8x1xf32>
    %136 = vector.broadcast %135 : vector<8x1xf32> to vector<8x128xf32>
    %137 = arith.mulf %132, %136 : vector<8x128xf32>
    %138 = vector.broadcast %9 : vector<1x128xf32> to vector<8x128xf32>
    %139 = arith.mulf %137, %138 : vector<8x128xf32>
    %140 = vector.broadcast %10 : vector<1x128xf32> to vector<8x128xf32>
    %141 = arith.addf %139, %140 : vector<8x128xf32>
    %142 = arith.truncf %141 : vector<8x128xf32> to vector<8x128xbf16>
    %c0_41 = arith.constant 0 : index
    %c0_42 = arith.constant 0 : index
    %c0_43 = arith.constant 0 : index
    %143 = vector.load %arg8[%c0_41, %c0_42, %c0_43] : memref<1x128x256xbf16, #tpu.memory_space<vmem>>, vector<1x128x256xbf16>
    %144 = vector.shape_cast %143 : vector<1x128x256xbf16> to vector<128x256xbf16>
    %cst_44 = arith.constant dense<0.000000e+00> : vector<8x256xf32>
    %145 = tpu.matmul %142, %144, %cst_44 {dimension_numbers = #tpu.dot_dimension_numbers<[1], [0], [0], [1], [0, 0, 1, 1], [], []>} : vector<8x128xbf16>, vector<128x256xbf16>, vector<8x256xf32> -> vector<8x256xf32>
    %c0_45 = arith.constant 0 : index
    %c0_46 = arith.constant 0 : index
    %c0_47 = arith.constant 0 : index
    %146 = vector.load %arg9[%c0_45, %c0_46, %c0_47] : memref<1x1x256xf32, #tpu.memory_space<vmem>>, vector<1x1x256xf32>
    %147 = vector.shape_cast %146 : vector<1x1x256xf32> to vector<1x256xf32>
    %148 = vector.broadcast %147 : vector<1x256xf32> to vector<8x256xf32>
    %149 = arith.addf %145, %148 : vector<8x256xf32>
    %150 = arith.mulf %149, %149 : vector<8x256xf32>
    %151 = arith.mulf %149, %150 : vector<8x256xf32>
    %cst_48 = arith.constant 4.471500e-02 : f32
    %152 = vector.broadcast %cst_48 : f32 to vector<8x256xf32>
    %153 = arith.mulf %152, %151 : vector<8x256xf32>
    %154 = arith.addf %149, %153 : vector<8x256xf32>
    %cst_49 = arith.constant 0.797884583 : f32
    %155 = vector.broadcast %cst_49 : f32 to vector<8x256xf32>
    %156 = arith.mulf %155, %154 : vector<8x256xf32>
    %157 = math.tanh %156 : vector<8x256xf32>
    %cst_50 = arith.constant 1.000000e+00 : f32
    %158 = vector.broadcast %cst_50 : f32 to vector<8x256xf32>
    %159 = arith.addf %158, %157 : vector<8x256xf32>
    %cst_51 = arith.constant 5.000000e-01 : f32
    %160 = vector.broadcast %cst_51 : f32 to vector<8x256xf32>
    %161 = arith.mulf %160, %159 : vector<8x256xf32>
    %162 = arith.mulf %149, %161 : vector<8x256xf32>
    %163 = arith.truncf %162 : vector<8x256xf32> to vector<8x256xbf16>
    %c0_52 = arith.constant 0 : index
    %c0_53 = arith.constant 0 : index
    %c0_54 = arith.constant 0 : index
    %164 = vector.load %arg10[%c0_52, %c0_53, %c0_54] : memref<1x256x128xbf16, #tpu.memory_space<vmem>>, vector<1x256x128xbf16>
    %165 = vector.shape_cast %164 : vector<1x256x128xbf16> to vector<256x128xbf16>
    %cst_55 = arith.constant dense<0.000000e+00> : vector<8x128xf32>
    %166 = tpu.matmul %163, %165, %cst_55 {dimension_numbers = #tpu.dot_dimension_numbers<[1], [0], [0], [1], [0, 0, 1, 1], [], []>} : vector<8x256xbf16>, vector<256x128xbf16>, vector<8x128xf32> -> vector<8x128xf32>
    %167 = vector.broadcast %11 : vector<1x128xf32> to vector<8x128xf32>
    %168 = arith.addf %166, %167 : vector<8x128xf32>
    %169 = arith.addf %141, %168 : vector<8x128xf32>
    %cst_56 = arith.constant dense<0.000000e+00> : vector<8xf32>
    %170 = vector.multi_reduction <add>, %169, %cst_56 [1] : vector<8x128xf32> to vector<8xf32>
    %171 = vector.shape_cast %170 : vector<8xf32> to vector<8x1xf32>
    %cst_57 = arith.constant 1.280000e+02 : f32
    %172 = vector.broadcast %cst_57 : f32 to vector<8x1xf32>
    %173 = arith.divf %171, %172 : vector<8x1xf32>
    %174 = vector.broadcast %173 : vector<8x1xf32> to vector<8x128xf32>
    %175 = arith.subf %169, %174 : vector<8x128xf32>
    %176 = arith.mulf %175, %175 : vector<8x128xf32>
    %cst_58 = arith.constant dense<0.000000e+00> : vector<8xf32>
    %177 = vector.multi_reduction <add>, %176, %cst_58 [1] : vector<8x128xf32> to vector<8xf32>
    %178 = vector.shape_cast %177 : vector<8xf32> to vector<8x1xf32>
    %cst_59 = arith.constant 1.280000e+02 : f32
    %179 = vector.broadcast %cst_59 : f32 to vector<8x1xf32>
    %180 = arith.divf %178, %179 : vector<8x1xf32>
    %181 = vector.broadcast %173 : vector<8x1xf32> to vector<8x128xf32>
    %182 = arith.subf %169, %181 : vector<8x128xf32>
    %cst_60 = arith.constant 9.99999974E-6 : f32
    %183 = vector.broadcast %cst_60 : f32 to vector<8x1xf32>
    %184 = arith.addf %180, %183 : vector<8x1xf32>
    %185 = math.rsqrt %184 : vector<8x1xf32>
    %186 = vector.broadcast %185 : vector<8x1xf32> to vector<8x128xf32>
    %187 = arith.mulf %182, %186 : vector<8x128xf32>
    %188 = vector.broadcast %12 : vector<1x128xf32> to vector<8x128xf32>
    %189 = arith.mulf %187, %188 : vector<8x128xf32>
    %190 = vector.broadcast %13 : vector<1x128xf32> to vector<8x128xf32>
    %191 = arith.addf %189, %190 : vector<8x128xf32>
    %192 = vector.shape_cast %191 : vector<8x128xf32> to vector<1x8x128xf32>
    %c0_61 = arith.constant 0 : index
    %c0_62 = arith.constant 0 : index
    %c0_63 = arith.constant 0 : index
    %193 = vector.load %arg14[%c0_61, %c0_62, %c0_63] : memref<1x8x128xf32, #tpu.memory_space<vmem>>, vector<1x8x128xf32>
    tpu.vector_store %arg14[%c0_61, %c0_62, %c0_63], %192 {strides = array<i32>} : memref<1x8x128xf32, #tpu.memory_space<vmem>>, vector<1x8x128xf32>,
    %c1_i32 = arith.constant 1 : i32
    %194 = arith.cmpi eq, %arg1, %c1_i32 : i32
    %195 = arith.extui %194 : i1 to i32
    %c0_i32_64 = arith.constant 0 : i32
    %196 = arith.cmpi ne, %195, %c0_i32_64 : i32
    scf.if %196 {
      %197 = vector.extract_strided_slice %191 {offsets = [0, 0], sizes = [1, 128], strides = [1, 1]} : vector<8x128xf32> to vector<1x128xf32>
      %198 = arith.truncf %197 : vector<1x128xf32> to vector<1x128xbf16>
      %c0_65 = arith.constant 0 : index
      %c0_66 = arith.constant 0 : index
      %199 = vector.load %arg12[%c0_65, %c0_66] : memref<128x128xbf16, #tpu.memory_space<vmem>>, vector<128x128xbf16>
      %cst_67 = arith.constant dense<0.000000e+00> : vector<1x128xf32>
      %200 = tpu.matmul %198, %199, %cst_67 {dimension_numbers = #tpu.dot_dimension_numbers<[1], [0], [0], [1], [0, 0, 1, 1], [], []>} : vector<1x128xbf16>, vector<128x128xbf16>, vector<1x128xf32> -> vector<1x128xf32>
      %c2 = arith.constant 2 : index
      %c0_68 = arith.constant 0 : index
      %201 = vector.load %arg4[%c2, %c0_68] : memref<3x128xf32, #tpu.memory_space<vmem>>, vector<1x128xf32>
      %202 = arith.addf %200, %201 : vector<1x128xf32>
      %203 = math.tanh %202 : vector<1x128xf32>
      %204 = vector.shape_cast %203 : vector<1x128xf32> to vector<1x1x128xf32>
      %c0_69 = arith.constant 0 : index
      %c0_70 = arith.constant 0 : index
      %c0_71 = arith.constant 0 : index
      %205 = vector.load %arg13[%c0_69, %c0_70, %c0_71] : memref<1x1x128xf32, #tpu.memory_space<vmem>>, vector<1x1x128xf32>
      tpu.vector_store %arg13[%c0_69, %c0_70, %c0_71], %204 {strides = array<i32>} : memref<1x1x128xf32, #tpu.memory_space<vmem>>, vector<1x1x128xf32>,
    } else {
    }
    return
  }
  func.func @transform_0(%arg0: i32, %arg1: i32) -> (i32, i32, i32) {
    %c0_i32 = arith.constant 0 : i32
    %c0_i32_0 = arith.constant 0 : i32
    %c0_i32_1 = arith.constant 0 : i32
    return %arg0, %c0_i32, %c0_i32_0 : i32, i32, i32
  }
  func.func @transform_1(%arg0: i32, %arg1: i32) -> (i32, i32, i32) {
    %c0_i32 = arith.constant 0 : i32
    %c0_i32_0 = arith.constant 0 : i32
    %c0_i32_1 = arith.constant 0 : i32
    return %arg0, %c0_i32, %c0_i32_0 : i32, i32, i32
  }
  func.func @transform_2(%arg0: i32, %arg1: i32) -> (i32, i32) {
    %c0_i32 = arith.constant 0 : i32
    %c0_i32_0 = arith.constant 0 : i32
    %c0_i32_1 = arith.constant 0 : i32
    return %c0_i32, %c0_i32_0 : i32, i32
  }
  func.func @transform_3(%arg0: i32, %arg1: i32) -> (i32, i32, i32) {
    %c0_i32 = arith.constant 0 : i32
    %c0_i32_0 = arith.constant 0 : i32
    %c0_i32_1 = arith.constant 0 : i32
    return %arg1, %c0_i32, %c0_i32_0 : i32, i32, i32
  }
  func.func @transform_4(%arg0: i32, %arg1: i32) -> (i32, i32, i32) {
    %c0_i32 = arith.constant 0 : i32
    %c0_i32_0 = arith.constant 0 : i32
    %c0_i32_1 = arith.constant 0 : i32
    return %arg1, %c0_i32, %c0_i32_0 : i32, i32, i32
  }
  func.func @transform_5(%arg0: i32, %arg1: i32) -> (i32, i32, i32) {
    %c0_i32 = arith.constant 0 : i32
    %c0_i32_0 = arith.constant 0 : i32
    %c0_i32_1 = arith.constant 0 : i32
    return %arg1, %c0_i32, %c0_i32_0 : i32, i32, i32
  }
  func.func @transform_6(%arg0: i32, %arg1: i32) -> (i32, i32, i32) {
    %c0_i32 = arith.constant 0 : i32
    %c0_i32_0 = arith.constant 0 : i32
    %c0_i32_1 = arith.constant 0 : i32
    return %arg1, %c0_i32, %c0_i32_0 : i32, i32, i32
  }
  func.func @transform_7(%arg0: i32, %arg1: i32) -> (i32, i32, i32) {
    %c0_i32 = arith.constant 0 : i32
    %c0_i32_0 = arith.constant 0 : i32
    %c0_i32_1 = arith.constant 0 : i32
    return %arg1, %c0_i32, %c0_i32_0 : i32, i32, i32
  }
  func.func @transform_8(%arg0: i32, %arg1: i32) -> (i32, i32, i32) {
    %c0_i32 = arith.constant 0 : i32
    %c0_i32_0 = arith.constant 0 : i32
    %c0_i32_1 = arith.constant 0 : i32
    return %arg1, %c0_i32, %c0_i32_0 : i32, i32, i32
  }
  func.func @transform_9(%arg0: i32, %arg1: i32) -> (i32, i32, i32) {
    %c0_i32 = arith.constant 0 : i32
    %c0_i32_0 = arith.constant 0 : i32
    %c0_i32_1 = arith.constant 0 : i32
    return %arg1, %c0_i32, %c0_i32_0 : i32, i32, i32
  }
  func.func @transform_10(%arg0: i32, %arg1: i32) -> (i32, i32) {
    %c0_i32 = arith.constant 0 : i32
    %c0_i32_0 = arith.constant 0 : i32
    %c0_i32_1 = arith.constant 0 : i32
    return %c0_i32, %c0_i32_0 : i32, i32
  }
  func.func @transform_11(%arg0: i32, %arg1: i32) -> (i32, i32, i32) {
    %c0_i32 = arith.constant 0 : i32
    %c0_i32_0 = arith.constant 0 : i32
    %c0_i32_1 = arith.constant 0 : i32
    return %arg0, %c0_i32, %c0_i32_0 : i32, i32, i32
  }
}

</mosaic_0001>

<llo_original>
// kernel: tpu_custom_call.1
$region0: #{tpu_custom_call.1}
  #allocation0 [shape = 'u32[]', space=smem, size = 0x4, offset = 0x4, fixed_abs, tag = 'smem constant byte address 0x4 - core index']
  #allocation1 [shape = 'u32[144,128]{1,0:T(1,128)}', space=vmem, size = 0x12000, scoped, tag = 'internal scratch']
  #allocation2 [shape = 'f32[1,8,128]{2,1,0:T(8,128)}', space=vmem, size = 0x1000, scoped, tag = 'scratch operand']
  %s0 = inlined_call_operand.vmem [shape: f32[2,8,128], index: 0, kind: input, shape index: {}]
  %s1 = inlined_call_operand.hbm [shape: f32[2,1,8], index: 1, kind: input, shape index: {}]
  %s2 = inlined_call_operand.vmem [shape: f32[3,128], index: 2, kind: input, shape index: {}]
  %s3 = inlined_call_operand.hbm [shape: bf16[2,128,384], index: 3, kind: input, shape index: {}]
  %s4 = inlined_call_operand.vmem [shape: f32[2,1,384], index: 4, kind: input, shape index: {}]
  %s5 = inlined_call_operand.hbm [shape: bf16[2,128,128], index: 5, kind: input, shape index: {}]
  %s6 = inlined_call_operand.hbm [shape: bf16[2,128,256], index: 6, kind: input, shape index: {}]
  %s7 = inlined_call_operand.vmem [shape: f32[2,1,256], index: 7, kind: input, shape index: {}]
  %s8 = inlined_call_operand.hbm [shape: bf16[2,256,128], index: 8, kind: input, shape index: {}]
  %s9 = inlined_call_operand.vmem [shape: f32[2,6,128], index: 9, kind: input, shape index: {}]
  %s10 = inlined_call_operand.hbm [shape: bf16[128,128], index: 10, kind: input, shape index: {}]
  %s11 = inlined_call_operand.hbm [shape: f32[2,1,128], index: 11, kind: output, shape index: {}]
  %s12 = sld [smem:[#allocation0]]
  $region109: #{tpu_custom_call.1} parent=0
    _
  %s14 = ssub.s32 1, %s12
  %s15 = scalar_select 0, %s14, %s12
  $region1: #{tpu_custom_call.1} parent=0
    #allocation3 [shape = 'u8[1024]{0}', space=vmem, size = 0x400, scoped, tag = 'input window, operand 1']
    #allocation4 [shape = 's32[2]{0}', space=sflag, size = 0x8, scoped, tag = 'scoped memory for tpu_custom_call.1']
    #allocation5 [shape = 's32[2]{0}', space=sflag, size = 0x8, scoped, tag = 'scoped memory for tpu_custom_call.1']
    #allocation6 [shape = 'u8[196608]{0}', space=vmem, size = 0x30000, scoped, tag = 'input window, operand 3']
    #allocation7 [shape = 's32[2]{0}', space=sflag, size = 0x8, scoped, tag = 'scoped memory for tpu_custom_call.1']
    #allocation8 [shape = 'u8[65536]{0}', space=vmem, size = 0x10000, scoped, tag = 'input window, operand 5']
    #allocation9 [shape = 'u8[131072]{0}', space=vmem, size = 0x20000, scoped, tag = 'input window, operand 6']
    #allocation10 [shape = 's32[2]{0}', space=sflag, size = 0x8, scoped, tag = 'scoped memory for tpu_custom_call.1']
    #allocation11 [shape = 'u8[131072]{0}', space=vmem, size = 0x20000, scoped, tag = 'input window, operand 8']
    #allocation12 [shape = 'u8[32768]{0}', space=vmem, size = 0x8000, scoped, tag = 'input window, operand 10, single buffered']
    #allocation13 [shape = 's32[1]{0}', space=sflag, size = 0x4, scoped, tag = 'scoped memory for tpu_custom_call.1']
    #allocation14 [shape = 'u8[1024]{0}', space=vmem, size = 0x400, scoped, tag = 'output window, operand 0']
    %16 = vsyncpa [#allocation4], 0
    %s17 = scalar_lea.sflag [#allocation4], 1
    %18 = vsyncpa %s17, 0
    %19 = vsyncpa [#allocation7], 0
    %s20 = scalar_lea.sflag [#allocation7], 1
    %21 = vsyncpa %s20, 0
    %22 = vsyncpa [#allocation10], 0
    %s23 = scalar_lea.sflag [#allocation10], 1
    %24 = vsyncpa %s23, 0
    %25 = vsyncpa [#allocation13], 0
    %26 = vsyncpa [#allocation5], 0
    %s27 = scalar_lea.sflag [#allocation5], 1
    %28 = vsyncpa %s27, 0
    loop: start=0, step=1, limit=6
    $region2: #{tpu_custom_call.1} parent=1 // loop_pre_header
      _
    $region3: #{tpu_custom_call.1} parent=1 // loop_header
      %s30 = sphi 0, %s34
      %p31 = scmp.ge.s32.totalorder %s30, 6
      %s37 = sphi 0, %s49
      %s38 = sphi 0, %s45
      %s39 = sphi 0, %s37
      %s40 = sphi 0, %s38
      %s41 = sphi 0, %s39
      %s42 = sphi 0, %s40
      %s52 = sphi 0, %s54
      %s55 = sphi 0, %s52
      %s56 = sphi 0, %s55
      %s72 = sphi 0, %s56
      %s78 = sphi 0, %s80
      %s81 = sphi 0, %s78
      %s82 = sphi 0, %s81
      %s98 = sphi 0, %s82
      %s102 = sphi 0, %s102
      %s104 = sphi 0, %s102
      %s105 = sphi 0, %s104
      %s119 = sphi 0, %s105
      %s125 = sphi 0, %s127
      %s128 = sphi 0, %s125
      %s129 = sphi 0, %s128
      %s145 = sphi 0, %s129
      %s151 = sphi 0, %s153
      %s154 = sphi 0, %s151
      %s155 = sphi 0, %s154
      %s171 = sphi 0, %s155
      %s177 = sphi 0, %s179
      %s180 = sphi 0, %s177
      %s181 = sphi 0, %s180
      %s197 = sphi 0, %s181
      %s203 = sphi 0, %s205
      %s206 = sphi 0, %s203
      %s207 = sphi 0, %s206
      %s223 = sphi 0, %s207
      %s229 = sphi 0, %s231
      %s232 = sphi 0, %s229
      %s233 = sphi 0, %s232
      %s249 = sphi 0, %s233
      %s255 = sphi 0, %s257
      %s258 = sphi 0, %s255
      %s259 = sphi 0, %s258
      %s275 = sphi 0, %s259
      %s281 = sphi 0, %s283
      %s284 = sphi 0, %s281
      %s285 = sphi 0, %s284
      %s301 = sphi 0, %s285
      %s305 = sphi 0, %s305
      %s307 = sphi 0, %s305
      %s308 = sphi 0, %s307
      %s322 = sphi 0, %s308
      %s328 = sphi 0, %s330
      %s331 = sphi 0, %s328
      %s332 = sphi 0, %s331
      %s348 = sphi 0, %s332
    $region4: #{tpu_custom_call.1} parent=1 // loop_header_branch
      %33 = sbr.rel (%p31) target = $region8
    $region5: #{tpu_custom_call.1} parent=1 // loop_body
      %s35 = ssub.s32 %s30, 1
      %s36 = ssub.s32 %s30, 2
      %s43 = sadd.s32 1, %s38
      %p44 = scmp.ge.s32.totalorder %s43, 2
      %s45 = scalar_select %p44, 0, %s43
      %s46 = sadd.s32 1, %s37
      %s47 = scalar_select %p44, %s46, %s37
      %p48 = scmp.ge.s32.totalorder %s47, 2
      %s49 = scalar_select %p48, 0, %s47
      %s50 = ssub.s32 %s37, %s49
      %p51 = scmp.eq.s32.totalorder %s50, 0
      %s53 = sadd.s32 %s52, 1
      %s54 = scalar_select %p51, %s52, %s53
      %p57 = pneg %p51
      %p58 = scmp.eq.s32.totalorder %s30, 3
      %p59 = por %p57, %p58
      %p60 = scmp.ne.s32.totalorder %s52, %s55
      %p61 = scmp.eq.s32.totalorder %s30, 0
      %p62 = por %p60, %p61
      %p63 = scmp.ne.s32.totalorder %s52, %s55
      %p64 = scmp.eq.s32.totalorder %s35, 3
      %p65 = por %p63, %p64
      %p66 = scmp.ne.s32.totalorder %s55, %s56
      %p67 = scmp.eq.s32.totalorder %s35, 0
      %p68 = por %p66, %p67
      %p69 = scmp.ne.s32.totalorder %s55, %s56
      %p70 = scmp.eq.s32.totalorder %s36, 3
      %p71 = por %p69, %p70
      %p73 = scmp.ne.s32.totalorder %s56, %s72
      %p74 = scmp.eq.s32.totalorder %s36, 0
      %p75 = por %p73, %p74
      %s76 = ssub.s32 %s37, %s49
      %p77 = scmp.eq.s32.totalorder %s76, 0
      %s79 = sadd.s32 %s78, 1
      %s80 = scalar_select %p77, %s78, %s79
      %p83 = pneg %p77
      %p84 = scmp.eq.s32.totalorder %s30, 3
      %p85 = por %p83, %p84
      %p86 = scmp.ne.s32.totalorder %s78, %s81
      %p87 = scmp.eq.s32.totalorder %s30, 0
      %p88 = por %p86, %p87
      %p89 = scmp.ne.s32.totalorder %s78, %s81
      %p90 = scmp.eq.s32.totalorder %s35, 3
      %p91 = por %p89, %p90
      %p92 = scmp.ne.s32.totalorder %s81, %s82
      %p93 = scmp.eq.s32.totalorder %s35, 0
      %p94 = por %p92, %p93
      %p95 = scmp.ne.s32.totalorder %s81, %s82
      %p96 = scmp.eq.s32.totalorder %s36, 3
      %p97 = por %p95, %p96
      %p99 = scmp.ne.s32.totalorder %s82, %s98
      %p100 = scmp.eq.s32.totalorder %s36, 0
      %p101 = por %p99, %p100
      %s103 = sadd.s32 %s102, 1
      %p106 = scmp.eq.s32.totalorder %s30, 3
      %p107 = scmp.ne.s32.totalorder %s102, %s104
      %p108 = scmp.eq.s32.totalorder %s30, 0
      %p109 = por %p107, %p108
      %p110 = scmp.ne.s32.totalorder %s102, %s104
      %p111 = scmp.eq.s32.totalorder %s35, 3
      %p112 = por %p110, %p111
      %p113 = scmp.ne.s32.totalorder %s104, %s105
      %p114 = scmp.eq.s32.totalorder %s35, 0
      %p115 = por %p113, %p114
      %p116 = scmp.ne.s32.totalorder %s104, %s105
      %p117 = scmp.eq.s32.totalorder %s36, 3
      %p118 = por %p116, %p117
      %p120 = scmp.ne.s32.totalorder %s105, %s119
      %p121 = scmp.eq.s32.totalorder %s36, 0
      %p122 = por %p120, %p121
      %s123 = ssub.s32 %s38, %s45
      %p124 = scmp.eq.s32.totalorder %s123, 0
      %s126 = sadd.s32 %s125, 1
      %s127 = scalar_select %p124, %s125, %s126
      %p130 = pneg %p124
      %p131 = scmp.eq.s32.totalorder %s30, 3
      %p132 = por %p130, %p131
      %p133 = scmp.ne.s32.totalorder %s125, %s128
      %p134 = scmp.eq.s32.totalorder %s30, 0
      %p135 = por %p133, %p134
      %p136 = scmp.ne.s32.totalorder %s125, %s128
      %p137 = scmp.eq.s32.totalorder %s35, 3
      %p138 = por %p136, %p137
      %p139 = scmp.ne.s32.totalorder %s128, %s129
      %p140 = scmp.eq.s32.totalorder %s35, 0
      %p141 = por %p139, %p140
      %p142 = scmp.ne.s32.totalorder %s128, %s129
      %p143 = scmp.eq.s32.totalorder %s36, 3
      %p144 = por %p142, %p143
      %p146 = scmp.ne.s32.totalorder %s129, %s145
      %p147 = scmp.eq.s32.totalorder %s36, 0
      %p148 = por %p146, %p147
      %s149 = ssub.s32 %s38, %s45
      %p150 = scmp.eq.s32.totalorder %s149, 0
      %s152 = sadd.s32 %s151, 1
      %s153 = scalar_select %p150, %s151, %s152
      %p156 = pneg %p150
      %p157 = scmp.eq.s32.totalorder %s30, 3
      %p158 = por %p156, %p157
      %p159 = scmp.ne.s32.totalorder %s151, %s154
      %p160 = scmp.eq.s32.totalorder %s30, 0
      %p161 = por %p159, %p160
      %p162 = scmp.ne.s32.totalorder %s151, %s154
      %p163 = scmp.eq.s32.totalorder %s35, 3
      %p164 = por %p162, %p163
      %p165 = scmp.ne.s32.totalorder %s154, %s155
      %p166 = scmp.eq.s32.totalorder %s35, 0
      %p167 = por %p165, %p166
      %p168 = scmp.ne.s32.totalorder %s154, %s155
      %p169 = scmp.eq.s32.totalorder %s36, 3
      %p170 = por %p168, %p169
      %p172 = scmp.ne.s32.totalorder %s155, %s171
      %p173 = scmp.eq.s32.totalorder %s36, 0
      %p174 = por %p172, %p173
      %s175 = ssub.s32 %s38, %s45
      %p176 = scmp.eq.s32.totalorder %s175, 0
      %s178 = sadd.s32 %s177, 1
      %s179 = scalar_select %p176, %s177, %s178
      %p182 = pneg %p176
      %p183 = scmp.eq.s32.totalorder %s30, 3
      %p184 = por %p182, %p183
      %p185 = scmp.ne.s32.totalorder %s177, %s180
      %p186 = scmp.eq.s32.totalorder %s30, 0
      %p187 = por %p185, %p186
      %p188 = scmp.ne.s32.totalorder %s177, %s180
      %p189 = scmp.eq.s32.totalorder %s35, 3
      %p190 = por %p188, %p189
      %p191 = scmp.ne.s32.totalorder %s180, %s181
      %p192 = scmp.eq.s32.totalorder %s35, 0
      %p193 = por %p191, %p192
      %p194 = scmp.ne.s32.totalorder %s180, %s181
      %p195 = scmp.eq.s32.totalorder %s36, 3
      %p196 = por %p194, %p195
      %p198 = scmp.ne.s32.totalorder %s181, %s197
      %p199 = scmp.eq.s32.totalorder %s36, 0
      %p200 = por %p198, %p199
      %s201 = ssub.s32 %s38, %s45
      %p202 = scmp.eq.s32.totalorder %s201, 0
      %s204 = sadd.s32 %s203, 1
      %s205 = scalar_select %p202, %s203, %s204
      %p208 = pneg %p202
      %p209 = scmp.eq.s32.totalorder %s30, 3
      %p210 = por %p208, %p209
      %p211 = scmp.ne.s32.totalorder %s203, %s206
      %p212 = scmp.eq.s32.totalorder %s30, 0
      %p213 = por %p211, %p212
      %p214 = scmp.ne.s32.totalorder %s203, %s206
      %p215 = scmp.eq.s32.totalorder %s35, 3
      %p216 = por %p214, %p215
      %p217 = scmp.ne.s32.totalorder %s206, %s207
      %p218 = scmp.eq.s32.totalorder %s35, 0
      %p219 = por %p217, %p218
      %p220 = scmp.ne.s32.totalorder %s206, %s207
      %p221 = scmp.eq.s32.totalorder %s36, 3
      %p222 = por %p220, %p221
      %p224 = scmp.ne.s32.totalorder %s207, %s223
      %p225 = scmp.eq.s32.totalorder %s36, 0
      %p226 = por %p224, %p225
      %s227 = ssub.s32 %s38, %s45
      %p228 = scmp.eq.s32.totalorder %s227, 0
      %s230 = sadd.s32 %s229, 1
      %s231 = scalar_select %p228, %s229, %s230
      %p234 = pneg %p228
      %p235 = scmp.eq.s32.totalorder %s30, 3
      %p236 = por %p234, %p235
      %p237 = scmp.ne.s32.totalorder %s229, %s232
      %p238 = scmp.eq.s32.totalorder %s30, 0
      %p239 = por %p237, %p238
      %p240 = scmp.ne.s32.totalorder %s229, %s232
      %p241 = scmp.eq.s32.totalorder %s35, 3
      %p242 = por %p240, %p241
      %p243 = scmp.ne.s32.totalorder %s232, %s233
      %p244 = scmp.eq.s32.totalorder %s35, 0
      %p245 = por %p243, %p244
      %p246 = scmp.ne.s32.totalorder %s232, %s233
      %p247 = scmp.eq.s32.totalorder %s36, 3
      %p248 = por %p246, %p247
      %p250 = scmp.ne.s32.totalorder %s233, %s249
      %p251 = scmp.eq.s32.totalorder %s36, 0
      %p252 = por %p250, %p251
      %s253 = ssub.s32 %s38, %s45
      %p254 = scmp.eq.s32.totalorder %s253, 0
      %s256 = sadd.s32 %s255, 1
      %s257 = scalar_select %p254, %s255, %s256
      %p260 = pneg %p254
      %p261 = scmp.eq.s32.totalorder %s30, 3
      %p262 = por %p260, %p261
      %p263 = scmp.ne.s32.totalorder %s255, %s258
      %p264 = scmp.eq.s32.totalorder %s30, 0
      %p265 = por %p263, %p264
      %p266 = scmp.ne.s32.totalorder %s255, %s258
      %p267 = scmp.eq.s32.totalorder %s35, 3
      %p268 = por %p266, %p267
      %p269 = scmp.ne.s32.totalorder %s258, %s259
      %p270 = scmp.eq.s32.totalorder %s35, 0
      %p271 = por %p269, %p270
      %p272 = scmp.ne.s32.totalorder %s258, %s259
      %p273 = scmp.eq.s32.totalorder %s36, 3
      %p274 = por %p272, %p273
      %p276 = scmp.ne.s32.totalorder %s259, %s275
      %p277 = scmp.eq.s32.totalorder %s36, 0
      %p278 = por %p276, %p277
      %s279 = ssub.s32 %s38, %s45
      %p280 = scmp.eq.s32.totalorder %s279, 0
      %s282 = sadd.s32 %s281, 1
      %s283 = scalar_select %p280, %s281, %s282
      %p286 = pneg %p280
      %p287 = scmp.eq.s32.totalorder %s30, 3
      %p288 = por %p286, %p287
      %p289 = scmp.ne.s32.totalorder %s281, %s284
      %p290 = scmp.eq.s32.totalorder %s30, 0
      %p291 = por %p289, %p290
      %p292 = scmp.ne.s32.totalorder %s281, %s284
      %p293 = scmp.eq.s32.totalorder %s35, 3
      %p294 = por %p292, %p293
      %p295 = scmp.ne.s32.totalorder %s284, %s285
      %p296 = scmp.eq.s32.totalorder %s35, 0
      %p297 = por %p295, %p296
      %p298 = scmp.ne.s32.totalorder %s284, %s285
      %p299 = scmp.eq.s32.totalorder %s36, 3
      %p300 = por %p298, %p299
      %p302 = scmp.ne.s32.totalorder %s285, %s301
      %p303 = scmp.eq.s32.totalorder %s36, 0
      %p304 = por %p302, %p303
      %s306 = sadd.s32 %s305, 1
      %p309 = scmp.eq.s32.totalorder %s30, 3
      %p310 = scmp.ne.s32.totalorder %s305, %s307
      %p311 = scmp.eq.s32.totalorder %s30, 0
      %p312 = por %p310, %p311
      %p313 = scmp.ne.s32.totalorder %s305, %s307
      %p314 = scmp.eq.s32.totalorder %s35, 3
      %p315 = por %p313, %p314
      %p316 = scmp.ne.s32.totalorder %s307, %s308
      %p317 = scmp.eq.s32.totalorder %s35, 0
      %p318 = por %p316, %p317
      %p319 = scmp.ne.s32.totalorder %s307, %s308
      %p320 = scmp.eq.s32.totalorder %s36, 3
      %p321 = por %p319, %p320
      %p323 = scmp.ne.s32.totalorder %s308, %s322
      %p324 = scmp.eq.s32.totalorder %s36, 0
      %p325 = por %p323, %p324
      %s326 = ssub.s32 %s37, %s49
      %p327 = scmp.eq.s32.totalorder %s326, 0
      %s329 = sadd.s32 %s328, 1
      %s330 = scalar_select %p327, %s328, %s329
      %p333 = pneg %p327
      %p334 = scmp.eq.s32.totalorder %s30, 3
      %p335 = por %p333, %p334
      %p336 = scmp.ne.s32.totalorder %s328, %s331
      %p337 = scmp.eq.s32.totalorder %s30, 0
      %p338 = por %p336, %p337
      %p339 = scmp.ne.s32.totalorder %s328, %s331
      %p340 = scmp.eq.s32.totalorder %s35, 3
      %p341 = por %p339, %p340
      %p342 = scmp.ne.s32.totalorder %s331, %s332
      %p343 = scmp.eq.s32.totalorder %s35, 0
      %p344 = por %p342, %p343
      %p345 = scmp.ne.s32.totalorder %s331, %s332
      %p346 = scmp.eq.s32.totalorder %s36, 3
      %p347 = por %p345, %p346
      %p349 = scmp.ne.s32.totalorder %s332, %s348
      %p350 = scmp.eq.s32.totalorder %s36, 0
      %p351 = por %p349, %p350
      %p352 = scmp.le.s32.totalorder 1, %s30
      %p353 = scmp.lt.s32.totalorder %s30, 5
      %p354 = pnand %p352, %p353
      %p355 = pneg %p354
      // Predicated region
      $region9: #{tpu_custom_call.1} parent=5 // pred_check
        _
      $region10: #{tpu_custom_call.1} parent=5 // pred_check_branch
        %357 = sbr.rel (%p354) target = $region12
      $region11: #{tpu_custom_call.1} parent=5 // pred_region
        %s358 = ssub.s32 %s30, 1
        // Predicated region
        $region13: #{tpu_custom_call.1} parent=11 // pred_check
          %p359 = pneg %p115
        $region14: #{tpu_custom_call.1} parent=11 // pred_check_branch
          %361 = sbr.rel (%p359) target = $region16
        $region15: #{tpu_custom_call.1} parent=11 // pred_region
          _
        $region16: #{tpu_custom_call.1} parent=11 // pred_fallthru
          _
        // Predicated region
        $region17: #{tpu_custom_call.1} parent=11 // pred_check
          %p362 = pneg %p318
        $region18: #{tpu_custom_call.1} parent=11 // pred_check_branch
          %364 = sbr.rel (%p362) target = $region20
        $region19: #{tpu_custom_call.1} parent=11 // pred_region
          %s366 = ssub.s32 1024, 1024
          %367 = vsyncadd [#allocation13], %s366
          %s368 = sshll.u32 [#allocation12], 4
          %s369 = int_to_ptr.vmem [resolvable:$true] %s368
          %374 = dma.hbm_to_vmem [thread:$0]  %s10, 1024, %s369, [#allocation13], 64, 64, 4
        $region20: #{tpu_custom_call.1} parent=11 // pred_fallthru
          _
      $region12: #{tpu_custom_call.1} parent=5 // pred_fallthru
        _
      %p375 = scmp.lt.s32.totalorder %s30, 4
      // Predicated region
      $region21: #{tpu_custom_call.1} parent=5 // pred_check
        %p376 = pneg %p375
      $region22: #{tpu_custom_call.1} parent=5 // pred_check_branch
        %378 = sbr.rel (%p376) target = $region24
      $region23: #{tpu_custom_call.1} parent=5 // pred_region
        // Predicated region
        $region25: #{tpu_custom_call.1} parent=23 // pred_check
          %p379 = pneg %p62
        $region26: #{tpu_custom_call.1} parent=23 // pred_check_branch
          %381 = sbr.rel (%p379) target = $region28
        $region27: #{tpu_custom_call.1} parent=23 // pred_region
          %p382 = scmp.lt.s32.totalorder %s37, 1
          %s383 = scalar_select %p382, %s37, 1
          %s384 = smul.addr %s383, 8
          %s385 = scalar_lea.vmem %s0, %s384
        $region28: #{tpu_custom_call.1} parent=23 // pred_fallthru
          _
        // Predicated region
        $region29: #{tpu_custom_call.1} parent=23 // pred_check
          %p386 = pneg %p88
        $region30: #{tpu_custom_call.1} parent=23 // pred_check_branch
          %388 = sbr.rel (%p386) target = $region32
        $region31: #{tpu_custom_call.1} parent=23 // pred_region
          %s389 = sand.u32 %s78, 1
          %s390 = scalar_lea.sflag [#allocation4], %s389
          %s391 = sand.u32 %s78, 1
          %s392 = scalar_lea.vmem [#allocation3], %s391
          %s394 = ssub.s32 16, 16
          %395 = vsyncadd %s390, %s394
          %s396 = smul.addr %s37, 16
          %s397 = scalar_lea.hbm %s1, %s396
          %s399 = sshll.u32 %s392, 4
          %s400 = int_to_ptr.vmem [resolvable:$true] %s399
          %402 = dma.hbm_to_vmem [thread:$0]  %s397, 16, %s400, %s390
        $region32: #{tpu_custom_call.1} parent=23 // pred_fallthru
          _
        // Predicated region
        $region33: #{tpu_custom_call.1} parent=23 // pred_check
          %p403 = pneg %p135
        $region34: #{tpu_custom_call.1} parent=23 // pred_check_branch
          %405 = sbr.rel (%p403) target = $region36
        $region35: #{tpu_custom_call.1} parent=23 // pred_region
          %s406 = sand.u32 %s30, 1
          %s407 = scalar_lea.sflag [#allocation7], %s406
          %s408 = sand.u32 %s125, 1
          %s409 = smul.addr %s408, 192
          %s410 = scalar_lea.vmem [#allocation6], %s409
          %s412 = ssub.s32 3072, 3072
          %413 = vsyncadd %s407, %s412
          %s414 = smul.addr %s38, 48
          %s415 = smul.addr %s414, 64
          %s416 = scalar_lea.hbm %s3, %s415
          %s417 = sshll.u32 %s410, 4
          %s418 = int_to_ptr.vmem [resolvable:$true] %s417
          %423 = dma.hbm_to_vmem [thread:$0]  %s416, 3072, %s418, %s407, 192, 192, 12
        $region36: #{tpu_custom_call.1} parent=23 // pred_fallthru
          _
        // Predicated region
        $region37: #{tpu_custom_call.1} parent=23 // pred_check
          %p424 = pneg %p161
        $region38: #{tpu_custom_call.1} parent=23 // pred_check_branch
          %426 = sbr.rel (%p424) target = $region40
        $region39: #{tpu_custom_call.1} parent=23 // pred_region
          %p427 = scmp.lt.s32.totalorder %s38, 1
          %s428 = scalar_select %p427, %s38, 1
          %s429 = smul.addr %s428, 3
          %s430 = scalar_lea.vmem %s4, %s429
        $region40: #{tpu_custom_call.1} parent=23 // pred_fallthru
          _
        // Predicated region
        $region41: #{tpu_custom_call.1} parent=23 // pred_check
          %p431 = pneg %p187
        $region42: #{tpu_custom_call.1} parent=23 // pred_check_branch
          %433 = sbr.rel (%p431) target = $region44
        $region43: #{tpu_custom_call.1} parent=23 // pred_region
          %s434 = sand.u32 %s30, 1
          %s435 = scalar_lea.sflag [#allocation7], %s434
          %s436 = sand.u32 %s177, 1
          %s437 = smul.addr %s436, 64
          %s438 = scalar_lea.vmem [#allocation8], %s437
          %s440 = ssub.s32 1024, 1024
          %441 = vsyncadd %s435, %s440
          %s442 = smul.addr %s38, 16
          %s443 = smul.addr %s442, 64
          %s444 = scalar_lea.hbm %s5, %s443
          %s445 = sshll.u32 %s438, 4
          %s446 = int_to_ptr.vmem [resolvable:$true] %s445
          %451 = dma.hbm_to_vmem [thread:$0]  %s444, 1024, %s446, %s435, 64, 64, 4
        $region44: #{tpu_custom_call.1} parent=23 // pred_fallthru
          _
        // Predicated region
        $region45: #{tpu_custom_call.1} parent=23 // pred_check
          %p452 = pneg %p213
        $region46: #{tpu_custom_call.1} parent=23 // pred_check_branch
          %454 = sbr.rel (%p452) target = $region48
        $region47: #{tpu_custom_call.1} parent=23 // pred_region
          %s455 = sand.u32 %s30, 1
          %s456 = scalar_lea.sflag [#allocation10], %s455
          %s457 = sand.u32 %s203, 1
          %s458 = smul.addr %s457, 128
          %s459 = scalar_lea.vmem [#allocation9], %s458
          %s461 = ssub.s32 2048, 2048
          %462 = vsyncadd %s456, %s461
          %s463 = smul.addr %s38, 32
          %s464 = smul.addr %s463, 64
          %s465 = scalar_lea.hbm %s6, %s464
          %s466 = sshll.u32 %s459, 4
          %s467 = int_to_ptr.vmem [resolvable:$true] %s466
          %472 = dma.hbm_to_vmem [thread:$0]  %s465, 2048, %s467, %s456, 128, 128, 8
        $region48: #{tpu_custom_call.1} parent=23 // pred_fallthru
          _
        // Predicated region
        $region49: #{tpu_custom_call.1} parent=23 // pred_check
          %p473 = pneg %p239
        $region50: #{tpu_custom_call.1} parent=23 // pred_check_branch
          %475 = sbr.rel (%p473) target = $region52
        $region51: #{tpu_custom_call.1} parent=23 // pred_region
          %p476 = scmp.lt.s32.totalorder %s38, 1
          %s477 = scalar_select %p476, %s38, 1
          %s478 = smul.addr %s477, 2
          %s479 = scalar_lea.vmem %s7, %s478
        $region52: #{tpu_custom_call.1} parent=23 // pred_fallthru
          _
        // Predicated region
        $region53: #{tpu_custom_call.1} parent=23 // pred_check
          %p480 = pneg %p265
        $region54: #{tpu_custom_call.1} parent=23 // pred_check_branch
          %482 = sbr.rel (%p480) target = $region56
        $region55: #{tpu_custom_call.1} parent=23 // pred_region
          %s483 = sand.u32 %s30, 1
          %s484 = scalar_lea.sflag [#allocation10], %s483
          %s485 = sand.u32 %s255, 1
          %s486 = smul.addr %s485, 128
          %s487 = scalar_lea.vmem [#allocation11], %s486
          %s489 = ssub.s32 2048, 2048
          %490 = vsyncadd %s484, %s489
          %s491 = smul.addr %s38, 32
          %s492 = smul.addr %s491, 64
          %s493 = scalar_lea.hbm %s8, %s492
          %s494 = sshll.u32 %s487, 4
          %s495 = int_to_ptr.vmem [resolvable:$true] %s494
          %500 = dma.hbm_to_vmem [thread:$0]  %s493, 2048, %s495, %s484, 64, 64, 4
        $region56: #{tpu_custom_call.1} parent=23 // pred_fallthru
          _
        // Predicated region
        $region57: #{tpu_custom_call.1} parent=23 // pred_check
          %p501 = pneg %p291
        $region58: #{tpu_custom_call.1} parent=23 // pred_check_branch
          %503 = sbr.rel (%p501) target = $region60
        $region59: #{tpu_custom_call.1} parent=23 // pred_region
          %p504 = scmp.lt.s32.totalorder %s38, 1
          %s505 = scalar_select %p504, %s38, 1
          %s506 = smul.addr %s505, 8
          %s507 = scalar_lea.vmem %s9, %s506
        $region60: #{tpu_custom_call.1} parent=23 // pred_fallthru
          _
      $region24: #{tpu_custom_call.1} parent=5 // pred_fallthru
        _
      %p508 = scmp.le.s32.totalorder 1, %s30
      %p509 = scmp.lt.s32.totalorder %s30, 5
      %p510 = pnand %p508, %p509
      %p511 = pneg %p510
      // Predicated region
      $region61: #{tpu_custom_call.1} parent=5 // pred_check
        _
      $region62: #{tpu_custom_call.1} parent=5 // pred_check_branch
        %513 = sbr.rel (%p510) target = $region64
      $region63: #{tpu_custom_call.1} parent=5 // pred_region
        %s514 = ssub.s32 %s30, 1
        %s515 = sand.u32 %s81, 1
        %s516 = scalar_lea.sflag [#allocation4], %s515
        %s517 = sand.u32 %s81, 1
        %s518 = scalar_lea.vmem [#allocation3], %s517
        // Predicated region
        $region65: #{tpu_custom_call.1} parent=63 // pred_check
          %p519 = pneg %p94
        $region66: #{tpu_custom_call.1} parent=63 // pred_check_branch
          %521 = sbr.rel (%p519) target = $region68
        $region67: #{tpu_custom_call.1} parent=63 // pred_region
          %522 = dma.done %s516, 16
        $region68: #{tpu_custom_call.1} parent=63 // pred_fallthru
          _
        %s523 = sand.u32 %s35, 1
        %s524 = scalar_lea.sflag [#allocation7], %s523
        %s525 = sand.u32 %s128, 1
        %s526 = smul.addr %s525, 192
        %s527 = scalar_lea.vmem [#allocation6], %s526
        // Predicated region
        $region69: #{tpu_custom_call.1} parent=63 // pred_check
          %p528 = pneg %p141
        $region70: #{tpu_custom_call.1} parent=63 // pred_check_branch
          %530 = sbr.rel (%p528) target = $region72
        $region71: #{tpu_custom_call.1} parent=63 // pred_region
          %531 = dma.done %s524, 3072
        $region72: #{tpu_custom_call.1} parent=63 // pred_fallthru
          _
        %s532 = sand.u32 %s35, 1
        %s533 = scalar_lea.sflag [#allocation7], %s532
        %s534 = sand.u32 %s180, 1
        %s535 = smul.addr %s534, 64
        %s536 = scalar_lea.vmem [#allocation8], %s535
        // Predicated region
        $region73: #{tpu_custom_call.1} parent=63 // pred_check
          %p537 = pneg %p193
        $region74: #{tpu_custom_call.1} parent=63 // pred_check_branch
          %539 = sbr.rel (%p537) target = $region76
        $region75: #{tpu_custom_call.1} parent=63 // pred_region
          %540 = dma.done %s533, 1024
        $region76: #{tpu_custom_call.1} parent=63 // pred_fallthru
          _
        %s541 = sand.u32 %s35, 1
        %s542 = scalar_lea.sflag [#allocation10], %s541
        %s543 = sand.u32 %s206, 1
        %s544 = smul.addr %s543, 128
        %s545 = scalar_lea.vmem [#allocation9], %s544
        // Predicated region
        $region77: #{tpu_custom_call.1} parent=63 // pred_check
          %p546 = pneg %p219
        $region78: #{tpu_custom_call.1} parent=63 // pred_check_branch
          %548 = sbr.rel (%p546) target = $region80
        $region79: #{tpu_custom_call.1} parent=63 // pred_region
          %549 = dma.done %s542, 2048
        $region80: #{tpu_custom_call.1} parent=63 // pred_fallthru
          _
        %s550 = sand.u32 %s35, 1
        %s551 = scalar_lea.sflag [#allocation10], %s550
        %s552 = sand.u32 %s258, 1
        %s553 = smul.addr %s552, 128
        %s554 = scalar_lea.vmem [#allocation11], %s553
        // Predicated region
        $region81: #{tpu_custom_call.1} parent=63 // pred_check
          %p555 = pneg %p271
        $region82: #{tpu_custom_call.1} parent=63 // pred_check_branch
          %557 = sbr.rel (%p555) target = $region84
        $region83: #{tpu_custom_call.1} parent=63 // pred_region
          %558 = dma.done %s551, 2048
        $region84: #{tpu_custom_call.1} parent=63 // pred_fallthru
          _
        // Predicated region
        $region85: #{tpu_custom_call.1} parent=63 // pred_check
          %p559 = pneg %p318
        $region86: #{tpu_custom_call.1} parent=63 // pred_check_branch
          %561 = sbr.rel (%p559) target = $region88
        $region87: #{tpu_custom_call.1} parent=63 // pred_region
          %562 = dma.done [#allocation13], 1024
        $region88: #{tpu_custom_call.1} parent=63 // pred_fallthru
          _
        %p563 = scmp.lt.s32.totalorder %s39, 1
        %s564 = scalar_select %p563, %s39, 1
        %s565 = smul.addr %s564, 8
        %s566 = scalar_lea.vmem %s0, %s565
        %p567 = pneg %p68
        %p568 = pneg %p65
        %s569 = sand.u32 %s81, 1
        %s570 = scalar_lea.sflag [#allocation4], %s569
        %s571 = sand.u32 %s81, 1
        %s572 = scalar_lea.vmem [#allocation3], %s571
        %p573 = pneg %p94
        %p574 = pneg %p91
        %p575 = pneg %p115
        %p576 = pneg %p112
        %s577 = sand.u32 %s35, 1
        %s578 = scalar_lea.sflag [#allocation7], %s577
        %s579 = sand.u32 %s128, 1
        %s580 = smul.addr %s579, 192
        %s581 = scalar_lea.vmem [#allocation6], %s580
        %p582 = pneg %p141
        %p583 = pneg %p138
        %p584 = scmp.lt.s32.totalorder %s40, 1
        %s585 = scalar_select %p584, %s40, 1
        %s586 = smul.addr %s585, 3
        %s587 = scalar_lea.vmem %s4, %s586
        %p588 = pneg %p167
        %p589 = pneg %p164
        %s590 = sand.u32 %s35, 1
        %s591 = scalar_lea.sflag [#allocation7], %s590
        %s592 = sand.u32 %s180, 1
        %s593 = smul.addr %s592, 64
        %s594 = scalar_lea.vmem [#allocation8], %s593
        %p595 = pneg %p193
        %p596 = pneg %p190
        %s597 = sand.u32 %s35, 1
        %s598 = scalar_lea.sflag [#allocation10], %s597
        %s599 = sand.u32 %s206, 1
        %s600 = smul.addr %s599, 128
        %s601 = scalar_lea.vmem [#allocation9], %s600
        %p602 = pneg %p219
        %p603 = pneg %p216
        %p604 = scmp.lt.s32.totalorder %s40, 1
        %s605 = scalar_select %p604, %s40, 1
        %s606 = smul.addr %s605, 2
        %s607 = scalar_lea.vmem %s7, %s606
        %p608 = pneg %p245
        %p609 = pneg %p242
        %s610 = sand.u32 %s35, 1
        %s611 = scalar_lea.sflag [#allocation10], %s610
        %s612 = sand.u32 %s258, 1
        %s613 = smul.addr %s612, 128
        %s614 = scalar_lea.vmem [#allocation11], %s613
        %p615 = pneg %p271
        %p616 = pneg %p268
        %p617 = scmp.lt.s32.totalorder %s40, 1
        %s618 = scalar_select %p617, %s40, 1
        %s619 = smul.addr %s618, 8
        %s620 = scalar_lea.vmem %s9, %s619
        %p621 = pneg %p297
        %p622 = pneg %p294
        %p623 = pneg %p318
        %p624 = pneg %p315
        %p625 = pneg %p344
        %p626 = pneg %p341
        %s627 = sand.u32 %s331, 1
        %s628 = scalar_lea.sflag [#allocation5], %s627
        %s629 = sand.u32 %s331, 1
        %s630 = scalar_lea.vmem [#allocation14], %s629
        %p631 = scmp.lt.s32.totalorder %s39, 1
        %s632 = scalar_select %p631, %s39, 1
        %s633 = smul.addr %s632, 8
        %s634 = scalar_lea.vmem %s0, %s633
        %p635 = scmp.lt.s32.totalorder %s40, 1
        %s636 = scalar_select %p635, %s40, 1
        %s637 = smul.addr %s636, 3
        %s638 = scalar_lea.vmem %s4, %s637
        %p639 = scmp.lt.s32.totalorder %s40, 1
        %s640 = scalar_select %p639, %s40, 1
        %s641 = smul.addr %s640, 2
        %s642 = scalar_lea.vmem %s7, %s641
        %p643 = scmp.lt.s32.totalorder %s40, 1
        %s644 = scalar_select %p643, %s40, 1
        %s645 = smul.addr %s644, 8
        %s646 = scalar_lea.vmem %s9, %s645
        %p648 = scmp.eq.s32.totalorder %s40, 0
        // Predicated region
        $region89: #{tpu_custom_call.1} parent=63 // pred_check
          %p649 = pneg %p648
        $region90: #{tpu_custom_call.1} parent=63 // pred_check_branch
          %651 = sbr.rel (%p649) target = $region92
        $region91: #{tpu_custom_call.1} parent=63 // pred_region
          %v652 = vld [vmem:[%s634] sm:$0xff]
          %v653 = vld [vmem:[%s2] sm:$0x1]
          %v654 = vld [vmem:[%s2 + $0x1] sm:$0x1]
          %655 = vadd.xlane.f32.xlu0 %v652
          %v656 = vpop.xlane.xlu0 %655
          %v657 = vrcp.pop 128.0
          %v658 = vmul.f32 %v656, %v657
          %v659 = vsub.f32 %v652, %v658
          %v660 = vmul.f32 %v659, %v659
          %661 = vadd.xlane.f32.xlu0 %v660
          %v662 = vpop.xlane.xlu0 %661
          %v663 = vmul.f32 %v662, %v657
          %v664 = vadd.f32 %v663, 1e-05
          %v665 = vrsqrt.pop %v664
          %v666 = vmul.f32 %v659, %v665
          %v667 = vlaneseq
          %v668 = vshrl.u32 %v667, 7
          %v669 = vsub.s32 0, %v668
          %v670 = vrot.slane %v653, %v669
          %v671 = vmul.f32 %v666, %v670
          %v672 = vlaneseq
          %v673 = vshrl.u32 %v672, 7
          %v674 = vsub.s32 0, %v673
          %v675 = vrot.slane %v654, %v674
          %v676 = vadd.f32 %v671, %v675
          %677 = vst [vmem:[#allocation2] sm:$0xff] %v676
        $region92: #{tpu_custom_call.1} parent=63 // pred_fallthru
          _
        %v678 = vld [vmem:[#allocation2] sm:$0xff]
        %v679 = vpack.c.bf16 %v678, %v678
        %v680 = vld [vmem:[%s646] sm:$0x3f]
        %v681 = vld [vmem:[%s527] sm:$0xff]
        %v682 = vld [vmem:[%s527 + $0x8] sm:$0xf]
        %v683 = vld [vmem:[%s527 + $0xc] sm:$0xff]
        %v684 = vld [vmem:[%s527 + $0x14] sm:$0xf]
        %v685 = vld [vmem:[%s527 + $0x18] sm:$0xff]
        %v686 = vld [vmem:[%s527 + $0x20] sm:$0xf]
        %v687 = vld [vmem:[%s527 + $0x24] sm:$0xff]
        %v688 = vld [vmem:[%s527 + $0x2c] sm:$0xf]
        %v689 = vld [vmem:[%s527 + $0x30] sm:$0xff]
        %v690 = vld [vmem:[%s527 + $0x38] sm:$0xf]
        %v691 = vld [vmem:[%s527 + $0x3c] sm:$0xff]
        %v692 = vld [vmem:[%s527 + $0x44] sm:$0xf]
        %v693 = vld [vmem:[%s527 + $0x48] sm:$0xff]
        %v694 = vld [vmem:[%s527 + $0x50] sm:$0xf]
        %v695 = vld [vmem:[%s527 + $0x54] sm:$0xff]
        %v696 = vld [vmem:[%s527 + $0x5c] sm:$0xf]
        %v697 = vld [vmem:[%s527 + $0x60] sm:$0xff]
        %v698 = vld [vmem:[%s527 + $0x68] sm:$0xf]
        %v699 = vld [vmem:[%s527 + $0x6c] sm:$0xff]
        %v700 = vld [vmem:[%s527 + $0x74] sm:$0xf]
        %v701 = vld [vmem:[%s527 + $0x78] sm:$0xff]
        %v702 = vld [vmem:[%s527 + $0x80] sm:$0xf]
        %v703 = vld [vmem:[%s527 + $0x84] sm:$0xff]
        %v704 = vld [vmem:[%s527 + $0x8c] sm:$0xf]
        %v705 = vld [vmem:[%s527 + $0x90] sm:$0xff]
        %v706 = vld [vmem:[%s527 + $0x98] sm:$0xf]
        %v707 = vld [vmem:[%s527 + $0x9c] sm:$0xff]
        %v708 = vld [vmem:[%s527 + $0xa4] sm:$0xf]
        %v709 = vld [vmem:[%s527 + $0xa8] sm:$0xff]
        %v710 = vld [vmem:[%s527 + $0xb0] sm:$0xf]
        %v711 = vld [vmem:[%s527 + $0xb4] sm:$0xff]
        %v712 = vld [vmem:[%s527 + $0xbc] sm:$0xf]
        %v713 = vld [vmem:[%s638] sm:$0x7]
        %v715 = vlaneseq
        %v716 = vshrl.u32 %v715, 7
        %v717 = vsub.s32 0, %v716
        %v718 = vrot.slane %v713, %v717
        %v719 = vlaneseq
        %v720 = vshrl.u32 %v719, 7
        %v721 = vsub.s32 1, %v720
        %v722 = vrot.slane %v713, %v721
        %v723 = vlaneseq
        %v724 = vshrl.u32 %v723, 7
        %v725 = vsub.s32 2, %v724
        %v726 = vrot.slane %v713, %v725
        %v762 = vunpack.c.l.b16 %v681
        %v763 = vunpack.c.h.b16 %v681
        %v764 = vunpack.c.l.b16 %v682
        %v765 = vunpack.c.l.b16 %v683
        %v766 = vunpack.c.h.b16 %v683
        %v767 = vunpack.c.l.b16 %v684
        %v768 = vunpack.c.l.b16 %v685
        %v769 = vunpack.c.h.b16 %v685
        %v770 = vunpack.c.l.b16 %v686
        %v771 = vunpack.c.l.b16 %v687
        %v772 = vunpack.c.h.b16 %v687
        %v773 = vunpack.c.l.b16 %v688
        %v774 = vunpack.c.l.b16 %v689
        %v775 = vunpack.c.h.b16 %v689
        %v776 = vunpack.c.l.b16 %v690
        %v777 = vunpack.c.l.b16 %v691
        %v778 = vunpack.c.h.b16 %v691
        %v779 = vunpack.c.l.b16 %v692
        %v780 = vunpack.c.l.b16 %v693
        %v781 = vunpack.c.h.b16 %v693
        %v782 = vunpack.c.l.b16 %v694
        %v783 = vunpack.c.l.b16 %v695
        %v784 = vunpack.c.h.b16 %v695
        %v785 = vunpack.c.l.b16 %v696
        %v786 = vunpack.c.l.b16 %v697
        %v787 = vunpack.c.h.b16 %v697
        %v788 = vunpack.c.l.b16 %v698
        %v789 = vunpack.c.l.b16 %v699
        %v790 = vunpack.c.h.b16 %v699
        %v791 = vunpack.c.l.b16 %v700
        %v792 = vunpack.c.l.b16 %v701
        %v793 = vunpack.c.h.b16 %v701
        %v794 = vunpack.c.l.b16 %v702
        %v795 = vunpack.c.l.b16 %v703
        %v796 = vunpack.c.h.b16 %v703
        %v797 = vunpack.c.l.b16 %v704
        %v798 = vunpack.c.l.b16 %v705
        %v799 = vunpack.c.h.b16 %v705
        %v800 = vunpack.c.l.b16 %v706
        %v801 = vunpack.c.l.b16 %v707
        %v802 = vunpack.c.h.b16 %v707
        %v803 = vunpack.c.l.b16 %v708
        %v804 = vunpack.c.l.b16 %v709
        %v805 = vunpack.c.h.b16 %v709
        %v806 = vunpack.c.l.b16 %v710
        %v807 = vunpack.c.l.b16 %v711
        %v808 = vunpack.c.h.b16 %v711
        %v809 = vunpack.c.l.b16 %v712
        %v810 = vpack.c.b16 %v765, %v762
        %v811 = vpack.c.b16 %v766, %v763
        %v812 = vpack.c.b16 %v767, %v764
        %v813 = vpack.c.b16 %v771, %v768
        %v814 = vpack.c.b16 %v772, %v769
        %v815 = vpack.c.b16 %v773, %v770
        %v816 = vpack.c.b16 %v777, %v774
        %v817 = vpack.c.b16 %v778, %v775
        %v818 = vpack.c.b16 %v779, %v776
        %v819 = vpack.c.b16 %v783, %v780
        %v820 = vpack.c.b16 %v784, %v781
        %v821 = vpack.c.b16 %v785, %v782
        %v822 = vpack.c.b16 %v789, %v786
        %v823 = vpack.c.b16 %v790, %v787
        %v824 = vpack.c.b16 %v791, %v788
        %v825 = vpack.c.b16 %v795, %v792
        %v826 = vpack.c.b16 %v796, %v793
        %v827 = vpack.c.b16 %v797, %v794
        %v828 = vpack.c.b16 %v801, %v798
        %v829 = vpack.c.b16 %v802, %v799
        %v830 = vpack.c.b16 %v803, %v800
        %v831 = vpack.c.b16 %v807, %v804
        %v832 = vpack.c.b16 %v808, %v805
        %v833 = vpack.c.b16 %v809, %v806
        %858 = vmatprep.subr.bf16.mxu0 %v832
        %859 = vmatpush1.bf16.msra.mxu0 %v831
        %860 = vmatprep.subr.bf16.mxu0 %v829
        %861 = vmatpush1.bf16.msra.mxu0 %v828
        %862 = vmatprep.subr.bf16.mxu0 %v826
        %863 = vmatpush1.bf16.msra.mxu0 %v825
        %864 = vmatprep.subr.bf16.mxu0 %v823
        %865 = vmatpush1.bf16.msra.mxu0 %v822
        %866 = vmatprep.subr.bf16.mxu0 %v820
        %867 = vmatpush1.bf16.msra.mxu0 %v819
        %868 = vmatprep.subr.bf16.mxu0 %v817
        %869 = vmatpush1.bf16.msra.mxu0 %v816
        %870 = vmatprep.subr.bf16.mxu0 %v814
        %871 = vmatpush1.bf16.msra.mxu0 %v813
        %872 = vmatprep.subr.bf16.mxu0 %v811
        %873 = vmatpush1.bf16.msra.mxu0 %v810
        %874 = vmatprep.subr.bf16.mxu0 0
        %875 = vmatpush2.bf16.msra.mxu0 0
        %876 = vmatprep.subr.bf16.mxu0 0
        %877 = vmatpush2.bf16.msra.mxu0 0
        %878 = vmatprep.subr.bf16.mxu0 0
        %879 = vmatpush2.bf16.msra.mxu0 0
        %880 = vmatprep.subr.bf16.mxu0 0
        %881 = vmatpush2.bf16.msra.mxu0 0
        %882 = vmatprep.subr.bf16.mxu0 0
        %883 = vmatpush2.bf16.msra.mxu0 0
        %884 = vmatprep.subr.bf16.mxu0 0
        %885 = vmatpush2.bf16.msra.mxu0 0
        %886 = vmatprep.subr.bf16.mxu0 0
        %887 = vmatpush2.bf16.msra.mxu0 0
        %888 = vmatprep.subr.bf16.mxu0 0
        %889 = vmatpush2.bf16.msra.mxu0 0
        %890 = vmatprep.mubr.bf16.mxu0 0
        %891 = vmatmul.mubr.bf16.gmra.mxu0 %v679
        %v892 = vpop.f32.mrf.mxu0
        %v893 = vadd.f32 %v718, %v892
        %v894 = vpop.f32.mrf.mxu0
        %v895 = vadd.f32 %v722, %v894
        %v896 = vpop.f32.mrf.mxu0
        %v897 = vpop.f32.mrf.mxu0
        %898 = vdwg.mxu0
        %899 = vmatprep.subr.bf16.mxu0 0
        %900 = vmatpush1.bf16.msra.mxu0 %v833
        %901 = vmatprep.subr.bf16.mxu0 0
        %902 = vmatpush1.bf16.msra.mxu0 %v830
        %903 = vmatprep.subr.bf16.mxu0 0
        %904 = vmatpush1.bf16.msra.mxu0 %v827
        %905 = vmatprep.subr.bf16.mxu0 0
        %906 = vmatpush1.bf16.msra.mxu0 %v824
        %907 = vmatprep.subr.bf16.mxu0 0
        %908 = vmatpush1.bf16.msra.mxu0 %v821
        %909 = vmatprep.subr.bf16.mxu0 0
        %910 = vmatpush1.bf16.msra.mxu0 %v818
        %911 = vmatprep.subr.bf16.mxu0 0
        %912 = vmatpush1.bf16.msra.mxu0 %v815
        %913 = vmatprep.subr.bf16.mxu0 0
        %914 = vmatpush1.bf16.msra.mxu0 %v812
        %915 = vmatprep.subr.bf16.mxu0 0
        %916 = vmatpush2.bf16.msra.mxu0 0
        %917 = vmatprep.subr.bf16.mxu0 0
        %918 = vmatpush2.bf16.msra.mxu0 0
        %919 = vmatprep.subr.bf16.mxu0 0
        %920 = vmatpush2.bf16.msra.mxu0 0
        %921 = vmatprep.subr.bf16.mxu0 0
        %922 = vmatpush2.bf16.msra.mxu0 0
        %923 = vmatprep.subr.bf16.mxu0 0
        %924 = vmatpush2.bf16.msra.mxu0 0
        %925 = vmatprep.subr.bf16.mxu0 0
        %926 = vmatpush2.bf16.msra.mxu0 0
        %927 = vmatprep.subr.bf16.mxu0 0
        %928 = vmatpush2.bf16.msra.mxu0 0
        %929 = vmatprep.subr.bf16.mxu0 0
        %930 = vmatpush2.bf16.msra.mxu0 0
        %931 = vmatprep.mubr.bf16.mxu0 0
        %932 = vmatmul.mubr.bf16.gmra.mxu0 %v679
        %v933 = vpop.f32.mrf.mxu0
        %v934 = vadd.f32 %v726, %v933
        %v935 = vpop.f32.mrf.mxu0
        %v936 = vpop.f32.mrf.mxu0
        %v937 = vpop.f32.mrf.mxu0
        %938 = vdwg.mxu0
        %v939 = vmul.f32 %v893, 0.17677669
        %v940 = vld [vmem:[%s518] sm:$0x1]
        %v941 = vpack.c.bf16 %v939, %v939
        %v942 = vpack.c.bf16 %v895, %v895
        %v944 = vlaneseq
        %v945 = vshrl.u32 %v944, 7
        %v946 = vsub.s32 0, %v945
        %v947 = vrot.slane %v940, %v946
        %vm949 = vcmask 261120
        %v951 = vsel %vm949, %v941, 0
        %v954 = vsel %vm949, %v942, 0
        %956 = vmatprep.subr.bf16.mxu0 0
        %957 = vmatpush1.bf16.xpose.msra.mxu0 0
        %958 = vmatprep.subr.bf16.mxu0 0
        %959 = vmatpush1.bf16.xpose.msra.mxu0 0
        %960 = vmatprep.subr.bf16.mxu0 0
        %961 = vmatpush1.bf16.xpose.msra.mxu0 0
        %962 = vmatprep.subr.bf16.mxu0 0
        %963 = vmatpush1.bf16.xpose.msra.mxu0 0
        %964 = vmatprep.subr.bf16.mxu0 0
        %965 = vmatpush1.bf16.xpose.msra.mxu0 0
        %966 = vmatprep.subr.bf16.mxu0 0
        %967 = vmatpush1.bf16.xpose.msra.mxu0 0
        %968 = vmatprep.subr.bf16.mxu0 0
        %969 = vmatpush1.bf16.xpose.msra.mxu0 0
        %970 = vmatprep.subr.bf16.mxu0 0
        %971 = vmatpush1.bf16.xpose.msra.mxu0 %v954
        %972 = vmatprep.subr.bf16.mxu0 0
        %973 = vmatpush2.bf16.xpose.msra.mxu0 0
        %974 = vmatprep.subr.bf16.mxu0 0
        %975 = vmatpush2.bf16.xpose.msra.mxu0 0
        %976 = vmatprep.subr.bf16.mxu0 0
        %977 = vmatpush2.bf16.xpose.msra.mxu0 0
        %978 = vmatprep.subr.bf16.mxu0 0
        %979 = vmatpush2.bf16.xpose.msra.mxu0 0
        %980 = vmatprep.subr.bf16.mxu0 0
        %981 = vmatpush2.bf16.xpose.msra.mxu0 0
        %982 = vmatprep.subr.bf16.mxu0 0
        %983 = vmatpush2.bf16.xpose.msra.mxu0 0
        %984 = vmatprep.subr.bf16.mxu0 0
        %985 = vmatpush2.bf16.xpose.msra.mxu0 0
        %986 = vmatprep.subr.bf16.mxu0 0
        %987 = vmatpush2.bf16.xpose.msra.mxu0 0
        %988 = vmatprep.mubr.bf16.mxu0 0
        %989 = vmatmul.mubr.bf16.gmra.mxu0 %v951
        %v990 = vpop.f32.mrf.mxu0
        %v991 = vadd.f32 %v947, %v990
        %v992 = vpop.f32.mrf.mxu0
        %v993 = vpop.f32.mrf.mxu0
        %v994 = vpop.f32.mrf.mxu0
        %995 = vdwg.mxu0
        %vm996 = vcmask 64512
        %v997 = vsel %vm996, %v991, -inf
        %998 = vmax.xlane.f32.xlu0 %v997
        %v999 = vpop.xlane.xlu0 %998
        %v1000 = vsub.f32 %v991, %v999
        %v1001 = vmul.f32 %v1000, 1.442695
        %v1002 = vpow.pop %v1001
        %v1003 = vsel %vm996, %v1002, 0.0
        %1004 = vadd.xlane.f32.xlu0 %v1003
        %v1005 = vpop.xlane.xlu0 %1004
        %v1006 = vrcp.pop %v1005
        %v1007 = vmul.f32 %v1002, %v1006
        %v1008 = vpack.c.bf16 %v1007, %v1007
        %v1009 = vpack.c.bf16 %v934, %v934
        %v1011 = vsel %vm996, %v1008, 0
        %vm1013 = vcmask 1043456
        %v1015 = vsel %vm1013, %v1009, 0
        %1017 = vmatprep.subr.bf16.mxu0 0
        %1018 = vmatpush1.bf16.msra.mxu0 0
        %1019 = vmatprep.subr.bf16.mxu0 0
        %1020 = vmatpush1.bf16.msra.mxu0 0
        %1021 = vmatprep.subr.bf16.mxu0 0
        %1022 = vmatpush1.bf16.msra.mxu0 0
        %1023 = vmatprep.subr.bf16.mxu0 0
        %1024 = vmatpush1.bf16.msra.mxu0 0
        %1025 = vmatprep.subr.bf16.mxu0 0
        %1026 = vmatpush1.bf16.msra.mxu0 0
        %1027 = vmatprep.subr.bf16.mxu0 0
        %1028 = vmatpush1.bf16.msra.mxu0 0
        %1029 = vmatprep.subr.bf16.mxu0 0
        %1030 = vmatpush1.bf16.msra.mxu0 0
        %1031 = vmatprep.subr.bf16.mxu0 0
        %1032 = vmatpush1.bf16.msra.mxu0 %v1015
        %1033 = vmatprep.subr.bf16.mxu0 0
        %1034 = vmatpush2.bf16.msra.mxu0 0
        %1035 = vmatprep.subr.bf16.mxu0 0
        %1036 = vmatpush2.bf16.msra.mxu0 0
        %1037 = vmatprep.subr.bf16.mxu0 0
        %1038 = vmatpush2.bf16.msra.mxu0 0
        %1039 = vmatprep.subr.bf16.mxu0 0
        %1040 = vmatpush2.bf16.msra.mxu0 0
        %1041 = vmatprep.subr.bf16.mxu0 0
        %1042 = vmatpush2.bf16.msra.mxu0 0
        %1043 = vmatprep.subr.bf16.mxu0 0
        %1044 = vmatpush2.bf16.msra.mxu0 0
        %1045 = vmatprep.subr.bf16.mxu0 0
        %1046 = vmatpush2.bf16.msra.mxu0 0
        %1047 = vmatprep.subr.bf16.mxu0 0
        %1048 = vmatpush2.bf16.msra.mxu0 0
        %1049 = vmatprep.mubr.bf16.mxu0 0
        %1050 = vmatmul.mubr.bf16.gmra.mxu0 %v1011
        %v1051 = vpop.f32.mrf.mxu0
        %v1052 = vadd.f32 0.0, %v1051
        %v1053 = vpop.f32.mrf.mxu0
        %v1054 = vpop.f32.mrf.mxu0
        %v1055 = vpop.f32.mrf.mxu0
        %1056 = vdwg.mxu0
        %1058 = vrot.lane.b32.xlu0 %v941, 96
        %v1059 = vpop.permute.xlu0 %1058
        %1061 = vrot.lane.b32.xlu0 %v942, 96
        %v1062 = vpop.permute.xlu0 %1061
        %v1064 = vsel %vm949, %v1059, 0
        %v1067 = vsel %vm949, %v1062, 0
        %1069 = vmatprep.subr.bf16.mxu0 0
        %1070 = vmatpush1.bf16.xpose.msra.mxu0 0
        %1071 = vmatprep.subr.bf16.mxu0 0
        %1072 = vmatpush1.bf16.xpose.msra.mxu0 0
        %1073 = vmatprep.subr.bf16.mxu0 0
        %1074 = vmatpush1.bf16.xpose.msra.mxu0 0
        %1075 = vmatprep.subr.bf16.mxu0 0
        %1076 = vmatpush1.bf16.xpose.msra.mxu0 0
        %1077 = vmatprep.subr.bf16.mxu0 0
        %1078 = vmatpush1.bf16.xpose.msra.mxu0 0
        %1079 = vmatprep.subr.bf16.mxu0 0
        %1080 = vmatpush1.bf16.xpose.msra.mxu0 0
        %1081 = vmatprep.subr.bf16.mxu0 0
        %1082 = vmatpush1.bf16.xpose.msra.mxu0 0
        %1083 = vmatprep.subr.bf16.mxu0 0
        %1084 = vmatpush1.bf16.xpose.msra.mxu0 %v1067
        %1085 = vmatprep.subr.bf16.mxu0 0
        %1086 = vmatpush2.bf16.xpose.msra.mxu0 0
        %1087 = vmatprep.subr.bf16.mxu0 0
        %1088 = vmatpush2.bf16.xpose.msra.mxu0 0
        %1089 = vmatprep.subr.bf16.mxu0 0
        %1090 = vmatpush2.bf16.xpose.msra.mxu0 0
        %1091 = vmatprep.subr.bf16.mxu0 0
        %1092 = vmatpush2.bf16.xpose.msra.mxu0 0
        %1093 = vmatprep.subr.bf16.mxu0 0
        %1094 = vmatpush2.bf16.xpose.msra.mxu0 0
        %1095 = vmatprep.subr.bf16.mxu0 0
        %1096 = vmatpush2.bf16.xpose.msra.mxu0 0
        %1097 = vmatprep.subr.bf16.mxu0 0
        %1098 = vmatpush2.bf16.xpose.msra.mxu0 0
        %1099 = vmatprep.subr.bf16.mxu0 0
        %1100 = vmatpush2.bf16.xpose.msra.mxu0 0
        %1101 = vmatprep.mubr.bf16.mxu0 0
        %1102 = vmatmul.mubr.bf16.gmra.mxu0 %v1064
        %v1103 = vpop.f32.mrf.mxu0
        %v1104 = vadd.f32 %v947, %v1103
        %v1105 = vpop.f32.mrf.mxu0
        %v1106 = vpop.f32.mrf.mxu0
        %v1107 = vpop.f32.mrf.mxu0
        %1108 = vdwg.mxu0
        %v1109 = vsel %vm996, %v1104, -inf
        %1110 = vmax.xlane.f32.xlu0 %v1109
        %v1111 = vpop.xlane.xlu0 %1110
        %v1112 = vsub.f32 %v1104, %v1111
        %v1113 = vmul.f32 %v1112, 1.442695
        %v1114 = vpow.pop %v1113
        %v1115 = vsel %vm996, %v1114, 0.0
        %1116 = vadd.xlane.f32.xlu0 %v1115
        %v1117 = vpop.xlane.xlu0 %1116
        %v1118 = vrcp.pop %v1117
        %v1119 = vmul.f32 %v1114, %v1118
        %v1120 = vpack.c.bf16 %v1119, %v1119
        %1122 = vrot.lane.b32.xlu0 %v1009, 96
        %v1123 = vpop.permute.xlu0 %1122
        %v1125 = vsel %vm996, %v1120, 0
        %v1128 = vsel %vm1013, %v1123, 0
        %1130 = vmatprep.subr.bf16.mxu0 0
        %1131 = vmatpush1.bf16.msra.mxu0 0
        %1132 = vmatprep.subr.bf16.mxu0 0
        %1133 = vmatpush1.bf16.msra.mxu0 0
        %1134 = vmatprep.subr.bf16.mxu0 0
        %1135 = vmatpush1.bf16.msra.mxu0 0
        %1136 = vmatprep.subr.bf16.mxu0 0
        %1137 = vmatpush1.bf16.msra.mxu0 0
        %1138 = vmatprep.subr.bf16.mxu0 0
        %1139 = vmatpush1.bf16.msra.mxu0 0
        %1140 = vmatprep.subr.bf16.mxu0 0
        %1141 = vmatpush1.bf16.msra.mxu0 0
        %1142 = vmatprep.subr.bf16.mxu0 0
        %1143 = vmatpush1.bf16.msra.mxu0 0
        %1144 = vmatprep.subr.bf16.mxu0 0
        %1145 = vmatpush1.bf16.msra.mxu0 %v1128
        %1146 = vmatprep.subr.bf16.mxu0 0
        %1147 = vmatpush2.bf16.msra.mxu0 0
        %1148 = vmatprep.subr.bf16.mxu0 0
        %1149 = vmatpush2.bf16.msra.mxu0 0
        %1150 = vmatprep.subr.bf16.mxu0 0
        %1151 = vmatpush2.bf16.msra.mxu0 0
        %1152 = vmatprep.subr.bf16.mxu0 0
        %1153 = vmatpush2.bf16.msra.mxu0 0
        %1154 = vmatprep.subr.bf16.mxu0 0
        %1155 = vmatpush2.bf16.msra.mxu0 0
        %1156 = vmatprep.subr.bf16.mxu0 0
        %1157 = vmatpush2.bf16.msra.mxu0 0
        %1158 = vmatprep.subr.bf16.mxu0 0
        %1159 = vmatpush2.bf16.msra.mxu0 0
        %1160 = vmatprep.subr.bf16.mxu0 0
        %1161 = vmatpush2.bf16.msra.mxu0 0
        %1162 = vmatprep.mubr.bf16.mxu0 0
        %1163 = vmatmul.mubr.bf16.gmra.mxu0 %v1125
        %v1164 = vpop.f32.mrf.mxu0
        %v1165 = vadd.f32 0.0, %v1164
        %v1166 = vpop.f32.mrf.mxu0
        %v1167 = vpop.f32.mrf.mxu0
        %v1168 = vpop.f32.mrf.mxu0
        %1169 = vdwg.mxu0
        %1170 = vrot.lane.b32.xlu0 %v941, 64
        %v1171 = vpop.permute.xlu0 %1170
        %1172 = vrot.lane.b32.xlu0 %v942, 64
        %v1173 = vpop.permute.xlu0 %1172
        %v1175 = vsel %vm949, %v1171, 0
        %v1178 = vsel %vm949, %v1173, 0
        %1180 = vmatprep.subr.bf16.mxu0 0
        %1181 = vmatpush1.bf16.xpose.msra.mxu0 0
        %1182 = vmatprep.subr.bf16.mxu0 0
        %1183 = vmatpush1.bf16.xpose.msra.mxu0 0
        %1184 = vmatprep.subr.bf16.mxu0 0
        %1185 = vmatpush1.bf16.xpose.msra.mxu0 0
        %1186 = vmatprep.subr.bf16.mxu0 0
        %1187 = vmatpush1.bf16.xpose.msra.mxu0 0
        %1188 = vmatprep.subr.bf16.mxu0 0
        %1189 = vmatpush1.bf16.xpose.msra.mxu0 0
        %1190 = vmatprep.subr.bf16.mxu0 0
        %1191 = vmatpush1.bf16.xpose.msra.mxu0 0
        %1192 = vmatprep.subr.bf16.mxu0 0
        %1193 = vmatpush1.bf16.xpose.msra.mxu0 0
        %1194 = vmatprep.subr.bf16.mxu0 0
        %1195 = vmatpush1.bf16.xpose.msra.mxu0 %v1178
        %1196 = vmatprep.subr.bf16.mxu0 0
        %1197 = vmatpush2.bf16.xpose.msra.mxu0 0
        %1198 = vmatprep.subr.bf16.mxu0 0
        %1199 = vmatpush2.bf16.xpose.msra.mxu0 0
        %1200 = vmatprep.subr.bf16.mxu0 0
        %1201 = vmatpush2.bf16.xpose.msra.mxu0 0
        %1202 = vmatprep.subr.bf16.mxu0 0
        %1203 = vmatpush2.bf16.xpose.msra.mxu0 0
        %1204 = vmatprep.subr.bf16.mxu0 0
        %1205 = vmatpush2.bf16.xpose.msra.mxu0 0
        %1206 = vmatprep.subr.bf16.mxu0 0
        %1207 = vmatpush2.bf16.xpose.msra.mxu0 0
        %1208 = vmatprep.subr.bf16.mxu0 0
        %1209 = vmatpush2.bf16.xpose.msra.mxu0 0
        %1210 = vmatprep.subr.bf16.mxu0 0
        %1211 = vmatpush2.bf16.xpose.msra.mxu0 0
        %1212 = vmatprep.mubr.bf16.mxu0 0
        %1213 = vmatmul.mubr.bf16.gmra.mxu0 %v1175
        %v1214 = vpop.f32.mrf.mxu0
        %v1215 = vadd.f32 %v947, %v1214
        %v1216 = vpop.f32.mrf.mxu0
        %v1217 = vpop.f32.mrf.mxu0
        %v1218 = vpop.f32.mrf.mxu0
        %1219 = vdwg.mxu0
        %v1220 = vsel %vm996, %v1215, -inf
        %1221 = vmax.xlane.f32.xlu0 %v1220
        %v1222 = vpop.xlane.xlu0 %1221
        %v1223 = vsub.f32 %v1215, %v1222
        %v1224 = vmul.f32 %v1223, 1.442695
        %v1225 = vpow.pop %v1224
        %v1226 = vsel %vm996, %v1225, 0.0
        %1227 = vadd.xlane.f32.xlu0 %v1226
        %v1228 = vpop.xlane.xlu0 %1227
        %v1229 = vrcp.pop %v1228
        %v1230 = vmul.f32 %v1225, %v1229
        %v1231 = vpack.c.bf16 %v1230, %v1230
        %1232 = vrot.lane.b32.xlu0 %v1009, 64
        %v1233 = vpop.permute.xlu0 %1232
        %v1235 = vsel %vm996, %v1231, 0
        %v1238 = vsel %vm1013, %v1233, 0
        %1240 = vmatprep.subr.bf16.mxu0 0
        %1241 = vmatpush1.bf16.msra.mxu0 0
        %1242 = vmatprep.subr.bf16.mxu0 0
        %1243 = vmatpush1.bf16.msra.mxu0 0
        %1244 = vmatprep.subr.bf16.mxu0 0
        %1245 = vmatpush1.bf16.msra.mxu0 0
        %1246 = vmatprep.subr.bf16.mxu0 0
        %1247 = vmatpush1.bf16.msra.mxu0 0
        %1248 = vmatprep.subr.bf16.mxu0 0
        %1249 = vmatpush1.bf16.msra.mxu0 0
        %1250 = vmatprep.subr.bf16.mxu0 0
        %1251 = vmatpush1.bf16.msra.mxu0 0
        %1252 = vmatprep.subr.bf16.mxu0 0
        %1253 = vmatpush1.bf16.msra.mxu0 0
        %1254 = vmatprep.subr.bf16.mxu0 0
        %1255 = vmatpush1.bf16.msra.mxu0 %v1238
        %1256 = vmatprep.subr.bf16.mxu0 0
        %1257 = vmatpush2.bf16.msra.mxu0 0
        %1258 = vmatprep.subr.bf16.mxu0 0
        %1259 = vmatpush2.bf16.msra.mxu0 0
        %1260 = vmatprep.subr.bf16.mxu0 0
        %1261 = vmatpush2.bf16.msra.mxu0 0
        %1262 = vmatprep.subr.bf16.mxu0 0
        %1263 = vmatpush2.bf16.msra.mxu0 0
        %1264 = vmatprep.subr.bf16.mxu0 0
        %1265 = vmatpush2.bf16.msra.mxu0 0
        %1266 = vmatprep.subr.bf16.mxu0 0
        %1267 = vmatpush2.bf16.msra.mxu0 0
        %1268 = vmatprep.subr.bf16.mxu0 0
        %1269 = vmatpush2.bf16.msra.mxu0 0
        %1270 = vmatprep.subr.bf16.mxu0 0
        %1271 = vmatpush2.bf16.msra.mxu0 0
        %1272 = vmatprep.mubr.bf16.mxu0 0
        %1273 = vmatmul.mubr.bf16.gmra.mxu0 %v1235
        %v1274 = vpop.f32.mrf.mxu0
        %v1275 = vadd.f32 0.0, %v1274
        %v1276 = vpop.f32.mrf.mxu0
        %v1277 = vpop.f32.mrf.mxu0
        %v1278 = vpop.f32.mrf.mxu0
        %1279 = vdwg.mxu0
        %1280 = vrot.lane.b32.xlu0 %v941, 32
        %v1281 = vpop.permute.xlu0 %1280
        %1282 = vrot.lane.b32.xlu0 %v942, 32
        %v1283 = vpop.permute.xlu0 %1282
        %v1285 = vsel %vm949, %v1281, 0
        %v1288 = vsel %vm949, %v1283, 0
        %1290 = vmatprep.subr.bf16.mxu0 0
        %1291 = vmatpush1.bf16.xpose.msra.mxu0 0
        %1292 = vmatprep.subr.bf16.mxu0 0
        %1293 = vmatpush1.bf16.xpose.msra.mxu0 0
        %1294 = vmatprep.subr.bf16.mxu0 0
        %1295 = vmatpush1.bf16.xpose.msra.mxu0 0
        %1296 = vmatprep.subr.bf16.mxu0 0
        %1297 = vmatpush1.bf16.xpose.msra.mxu0 0
        %1298 = vmatprep.subr.bf16.mxu0 0
        %1299 = vmatpush1.bf16.xpose.msra.mxu0 0
        %1300 = vmatprep.subr.bf16.mxu0 0
        %1301 = vmatpush1.bf16.xpose.msra.mxu0 0
        %1302 = vmatprep.subr.bf16.mxu0 0
        %1303 = vmatpush1.bf16.xpose.msra.mxu0 0
        %1304 = vmatprep.subr.bf16.mxu0 0
        %1305 = vmatpush1.bf16.xpose.msra.mxu0 %v1288
        %1306 = vmatprep.subr.bf16.mxu0 0
        %1307 = vmatpush2.bf16.xpose.msra.mxu0 0
        %1308 = vmatprep.subr.bf16.mxu0 0
        %1309 = vmatpush2.bf16.xpose.msra.mxu0 0
        %1310 = vmatprep.subr.bf16.mxu0 0
        %1311 = vmatpush2.bf16.xpose.msra.mxu0 0
        %1312 = vmatprep.subr.bf16.mxu0 0
        %1313 = vmatpush2.bf16.xpose.msra.mxu0 0
        %1314 = vmatprep.subr.bf16.mxu0 0
        %1315 = vmatpush2.bf16.xpose.msra.mxu0 0
        %1316 = vmatprep.subr.bf16.mxu0 0
        %1317 = vmatpush2.bf16.xpose.msra.mxu0 0
        %1318 = vmatprep.subr.bf16.mxu0 0
        %1319 = vmatpush2.bf16.xpose.msra.mxu0 0
        %1320 = vmatprep.subr.bf16.mxu0 0
        %1321 = vmatpush2.bf16.xpose.msra.mxu0 0
        %1322 = vmatprep.mubr.bf16.mxu0 0
        %1323 = vmatmul.mubr.bf16.gmra.mxu0 %v1285
        %v1324 = vpop.f32.mrf.mxu0
        %v1325 = vadd.f32 %v947, %v1324
        %v1326 = vpop.f32.mrf.mxu0
        %v1327 = vpop.f32.mrf.mxu0
        %v1328 = vpop.f32.mrf.mxu0
        %1329 = vdwg.mxu0
        %v1330 = vsel %vm996, %v1325, -inf
        %1331 = vmax.xlane.f32.xlu0 %v1330
        %v1332 = vpop.xlane.xlu0 %1331
        %v1333 = vsub.f32 %v1325, %v1332
        %v1334 = vmul.f32 %v1333, 1.442695
        %v1335 = vpow.pop %v1334
        %v1336 = vsel %vm996, %v1335, 0.0
        %1337 = vadd.xlane.f32.xlu0 %v1336
        %v1338 = vpop.xlane.xlu0 %1337
        %v1339 = vrcp.pop %v1338
        %v1340 = vmul.f32 %v1335, %v1339
        %v1341 = vpack.c.bf16 %v1340, %v1340
        %1342 = vrot.lane.b32.xlu0 %v1009, 32
        %v1343 = vpop.permute.xlu0 %1342
        %v1345 = vsel %vm996, %v1341, 0
        %v1348 = vsel %vm1013, %v1343, 0
        %1350 = vmatprep.subr.bf16.mxu0 0
        %1351 = vmatpush1.bf16.msra.mxu0 0
        %1352 = vmatprep.subr.bf16.mxu0 0
        %1353 = vmatpush1.bf16.msra.mxu0 0
        %1354 = vmatprep.subr.bf16.mxu0 0
        %1355 = vmatpush1.bf16.msra.mxu0 0
        %1356 = vmatprep.subr.bf16.mxu0 0
        %1357 = vmatpush1.bf16.msra.mxu0 0
        %1358 = vmatprep.subr.bf16.mxu0 0
        %1359 = vmatpush1.bf16.msra.mxu0 0
        %1360 = vmatprep.subr.bf16.mxu0 0
        %1361 = vmatpush1.bf16.msra.mxu0 0
        %1362 = vmatprep.subr.bf16.mxu0 0
        %1363 = vmatpush1.bf16.msra.mxu0 0
        %1364 = vmatprep.subr.bf16.mxu0 0
        %1365 = vmatpush1.bf16.msra.mxu0 %v1348
        %1366 = vmatprep.subr.bf16.mxu0 0
        %1367 = vmatpush2.bf16.msra.mxu0 0
        %1368 = vmatprep.subr.bf16.mxu0 0
        %1369 = vmatpush2.bf16.msra.mxu0 0
        %1370 = vmatprep.subr.bf16.mxu0 0
        %1371 = vmatpush2.bf16.msra.mxu0 0
        %1372 = vmatprep.subr.bf16.mxu0 0
        %1373 = vmatpush2.bf16.msra.mxu0 0
        %1374 = vmatprep.subr.bf16.mxu0 0
        %1375 = vmatpush2.bf16.msra.mxu0 0
        %1376 = vmatprep.subr.bf16.mxu0 0
        %1377 = vmatpush2.bf16.msra.mxu0 0
        %1378 = vmatprep.subr.bf16.mxu0 0
        %1379 = vmatpush2.bf16.msra.mxu0 0
        %1380 = vmatprep.subr.bf16.mxu0 0
        %1381 = vmatpush2.bf16.msra.mxu0 0
        %1382 = vmatprep.mubr.bf16.mxu0 0
        %1383 = vmatmul.mubr.bf16.gmra.mxu0 %v1345
        %v1384 = vpop.f32.mrf.mxu0
        %v1385 = vadd.f32 0.0, %v1384
        %v1386 = vpop.f32.mrf.mxu0
        %v1387 = vpop.f32.mrf.mxu0
        %v1388 = vpop.f32.mrf.mxu0
        %1389 = vdwg.mxu0
        %1391 = vrot.lane.b32.xlu0 %v1165, 32
        %v1392 = vpop.permute.xlu0 %1391
        %1395 = vrot.lane.b32.xlu0 %v1275, 64
        %v1396 = vpop.permute.xlu0 %1395
        %1399 = vrot.lane.b32.xlu0 %v1385, 96
        %v1400 = vpop.permute.xlu0 %1399
        %v1402 = vsel %vm949, %v1052, %v1392
        %vm1403 = vcmask 523264
        %v1404 = vsel %vm1403, %v1402, %v1396
        %vm1405 = vcmask 785408
        %v1406 = vsel %vm1405, %v1404, %v1400
        %v1407 = vpack.c.bf16 %v1406, %v1406
        %v1408 = vld [vmem:[%s536] sm:$0xf]
        %v1409 = vld [vmem:[%s536 + $0x4] sm:$0xf]
        %v1410 = vld [vmem:[%s536 + $0x8] sm:$0xf]
        %v1411 = vld [vmem:[%s536 + $0xc] sm:$0xf]
        %v1412 = vld [vmem:[%s536 + $0x10] sm:$0xf]
        %v1413 = vld [vmem:[%s536 + $0x14] sm:$0xf]
        %v1414 = vld [vmem:[%s536 + $0x18] sm:$0xf]
        %v1415 = vld [vmem:[%s536 + $0x1c] sm:$0xf]
        %v1416 = vld [vmem:[%s536 + $0x20] sm:$0xf]
        %v1417 = vld [vmem:[%s536 + $0x24] sm:$0xf]
        %v1418 = vld [vmem:[%s536 + $0x28] sm:$0xf]
        %v1419 = vld [vmem:[%s536 + $0x2c] sm:$0xf]
        %v1420 = vld [vmem:[%s536 + $0x30] sm:$0xf]
        %v1421 = vld [vmem:[%s536 + $0x34] sm:$0xf]
        %v1422 = vld [vmem:[%s536 + $0x38] sm:$0xf]
        %v1423 = vld [vmem:[%s536 + $0x3c] sm:$0xf]
        %v1424 = vlaneseq
        %v1425 = vshrl.u32 %v1424, 7
        %v1426 = vsub.s32 0, %v1425
        %v1427 = vrot.slane %v680, %v1426
        %v1444 = vunpack.c.l.b16 %v1408
        %v1445 = vunpack.c.l.b16 %v1409
        %v1446 = vunpack.c.l.b16 %v1410
        %v1447 = vunpack.c.l.b16 %v1411
        %v1448 = vunpack.c.l.b16 %v1412
        %v1449 = vunpack.c.l.b16 %v1413
        %v1450 = vunpack.c.l.b16 %v1414
        %v1451 = vunpack.c.l.b16 %v1415
        %v1452 = vunpack.c.l.b16 %v1416
        %v1453 = vunpack.c.l.b16 %v1417
        %v1454 = vunpack.c.l.b16 %v1418
        %v1455 = vunpack.c.l.b16 %v1419
        %v1456 = vunpack.c.l.b16 %v1420
        %v1457 = vunpack.c.l.b16 %v1421
        %v1458 = vunpack.c.l.b16 %v1422
        %v1459 = vunpack.c.l.b16 %v1423
        %v1460 = vpack.c.b16 %v1445, %v1444
        %v1461 = vpack.c.b16 %v1447, %v1446
        %v1462 = vpack.c.b16 %v1449, %v1448
        %v1463 = vpack.c.b16 %v1451, %v1450
        %v1464 = vpack.c.b16 %v1453, %v1452
        %v1465 = vpack.c.b16 %v1455, %v1454
        %v1466 = vpack.c.b16 %v1457, %v1456
        %v1467 = vpack.c.b16 %v1459, %v1458
        %1476 = vmatprep.subr.bf16.mxu0 0
        %1477 = vmatpush1.bf16.msra.mxu0 %v1467
        %1478 = vmatprep.subr.bf16.mxu0 0
        %1479 = vmatpush1.bf16.msra.mxu0 %v1466
        %1480 = vmatprep.subr.bf16.mxu0 0
        %1481 = vmatpush1.bf16.msra.mxu0 %v1465
        %1482 = vmatprep.subr.bf16.mxu0 0
        %1483 = vmatpush1.bf16.msra.mxu0 %v1464
        %1484 = vmatprep.subr.bf16.mxu0 0
        %1485 = vmatpush1.bf16.msra.mxu0 %v1463
        %1486 = vmatprep.subr.bf16.mxu0 0
        %1487 = vmatpush1.bf16.msra.mxu0 %v1462
        %1488 = vmatprep.subr.bf16.mxu0 0
        %1489 = vmatpush1.bf16.msra.mxu0 %v1461
        %1490 = vmatprep.subr.bf16.mxu0 0
        %1491 = vmatpush1.bf16.msra.mxu0 %v1460
        %1492 = vmatprep.subr.bf16.mxu0 0
        %1493 = vmatpush2.bf16.msra.mxu0 0
        %1494 = vmatprep.subr.bf16.mxu0 0
        %1495 = vmatpush2.bf16.msra.mxu0 0
        %1496 = vmatprep.subr.bf16.mxu0 0
        %1497 = vmatpush2.bf16.msra.mxu0 0
        %1498 = vmatprep.subr.bf16.mxu0 0
        %1499 = vmatpush2.bf16.msra.mxu0 0
        %1500 = vmatprep.subr.bf16.mxu0 0
        %1501 = vmatpush2.bf16.msra.mxu0 0
        %1502 = vmatprep.subr.bf16.mxu0 0
        %1503 = vmatpush2.bf16.msra.mxu0 0
        %1504 = vmatprep.subr.bf16.mxu0 0
        %1505 = vmatpush2.bf16.msra.mxu0 0
        %1506 = vmatprep.subr.bf16.mxu0 0
        %1507 = vmatpush2.bf16.msra.mxu0 0
        %1508 = vmatprep.mubr.bf16.mxu0 0
        %1509 = vmatmul.mubr.bf16.gmra.mxu0 %v1407
        %v1510 = vpop.f32.mrf.mxu0
        %v1511 = vadd.f32 %v1427, %v1510
        %v1512 = vpop.f32.mrf.mxu0
        %v1513 = vpop.f32.mrf.mxu0
        %v1514 = vpop.f32.mrf.mxu0
        %1515 = vdwg.mxu0
        %v1516 = vadd.f32 %v678, %v1511
        %1517 = vadd.xlane.f32.xlu0 %v1516
        %v1518 = vpop.xlane.xlu0 %1517
        %v1519 = vrcp.pop 128.0
        %v1520 = vmul.f32 %v1518, %v1519
        %v1521 = vsub.f32 %v1516, %v1520
        %v1522 = vmul.f32 %v1521, %v1521
        %1523 = vadd.xlane.f32.xlu0 %v1522
        %v1524 = vpop.xlane.xlu0 %1523
        %v1525 = vmul.f32 %v1524, %v1519
        %v1526 = vadd.f32 %v1525, 1e-05
        %v1527 = vrsqrt.pop %v1526
        %v1528 = vmul.f32 %v1521, %v1527
        %v1529 = vlaneseq
        %v1530 = vshrl.u32 %v1529, 7
        %v1531 = vsub.s32 1, %v1530
        %v1532 = vrot.slane %v680, %v1531
        %v1533 = vmul.f32 %v1528, %v1532
        %v1534 = vlaneseq
        %v1535 = vshrl.u32 %v1534, 7
        %v1536 = vsub.s32 2, %v1535
        %v1537 = vrot.slane %v680, %v1536
        %v1538 = vadd.f32 %v1533, %v1537
        %v1539 = vpack.c.bf16 %v1538, %v1538
        %v1540 = vld [vmem:[%s545] sm:$0xff]
        %v1541 = vld [vmem:[%s545 + $0x8] sm:$0xff]
        %v1542 = vld [vmem:[%s545 + $0x10] sm:$0xff]
        %v1543 = vld [vmem:[%s545 + $0x18] sm:$0xff]
        %v1544 = vld [vmem:[%s545 + $0x20] sm:$0xff]
        %v1545 = vld [vmem:[%s545 + $0x28] sm:$0xff]
        %v1546 = vld [vmem:[%s545 + $0x30] sm:$0xff]
        %v1547 = vld [vmem:[%s545 + $0x38] sm:$0xff]
        %v1548 = vld [vmem:[%s545 + $0x40] sm:$0xff]
        %v1549 = vld [vmem:[%s545 + $0x48] sm:$0xff]
        %v1550 = vld [vmem:[%s545 + $0x50] sm:$0xff]
        %v1551 = vld [vmem:[%s545 + $0x58] sm:$0xff]
        %v1552 = vld [vmem:[%s545 + $0x60] sm:$0xff]
        %v1553 = vld [vmem:[%s545 + $0x68] sm:$0xff]
        %v1554 = vld [vmem:[%s545 + $0x70] sm:$0xff]
        %v1555 = vld [vmem:[%s545 + $0x78] sm:$0xff]
        %v1556 = vld [vmem:[%s642] sm:$0x3]
        %v1558 = vlaneseq
        %v1559 = vshrl.u32 %v1558, 7
        %v1560 = vsub.s32 0, %v1559
        %v1561 = vrot.slane %v1556, %v1560
        %v1562 = vlaneseq
        %v1563 = vshrl.u32 %v1562, 7
        %v1564 = vsub.s32 1, %v1563
        %v1565 = vrot.slane %v1556, %v1564
        %v1584 = vunpack.c.l.b16 %v1540
        %v1585 = vunpack.c.h.b16 %v1540
        %v1586 = vunpack.c.l.b16 %v1541
        %v1587 = vunpack.c.h.b16 %v1541
        %v1588 = vunpack.c.l.b16 %v1542
        %v1589 = vunpack.c.h.b16 %v1542
        %v1590 = vunpack.c.l.b16 %v1543
        %v1591 = vunpack.c.h.b16 %v1543
        %v1592 = vunpack.c.l.b16 %v1544
        %v1593 = vunpack.c.h.b16 %v1544
        %v1594 = vunpack.c.l.b16 %v1545
        %v1595 = vunpack.c.h.b16 %v1545
        %v1596 = vunpack.c.l.b16 %v1546
        %v1597 = vunpack.c.h.b16 %v1546
        %v1598 = vunpack.c.l.b16 %v1547
        %v1599 = vunpack.c.h.b16 %v1547
        %v1600 = vunpack.c.l.b16 %v1548
        %v1601 = vunpack.c.h.b16 %v1548
        %v1602 = vunpack.c.l.b16 %v1549
        %v1603 = vunpack.c.h.b16 %v1549
        %v1604 = vunpack.c.l.b16 %v1550
        %v1605 = vunpack.c.h.b16 %v1550
        %v1606 = vunpack.c.l.b16 %v1551
        %v1607 = vunpack.c.h.b16 %v1551
        %v1608 = vunpack.c.l.b16 %v1552
        %v1609 = vunpack.c.h.b16 %v1552
        %v1610 = vunpack.c.l.b16 %v1553
        %v1611 = vunpack.c.h.b16 %v1553
        %v1612 = vunpack.c.l.b16 %v1554
        %v1613 = vunpack.c.h.b16 %v1554
        %v1614 = vunpack.c.l.b16 %v1555
        %v1615 = vunpack.c.h.b16 %v1555
        %v1616 = vpack.c.b16 %v1586, %v1584
        %v1617 = vpack.c.b16 %v1587, %v1585
        %v1618 = vpack.c.b16 %v1590, %v1588
        %v1619 = vpack.c.b16 %v1591, %v1589
        %v1620 = vpack.c.b16 %v1594, %v1592
        %v1621 = vpack.c.b16 %v1595, %v1593
        %v1622 = vpack.c.b16 %v1598, %v1596
        %v1623 = vpack.c.b16 %v1599, %v1597
        %v1624 = vpack.c.b16 %v1602, %v1600
        %v1625 = vpack.c.b16 %v1603, %v1601
        %v1626 = vpack.c.b16 %v1606, %v1604
        %v1627 = vpack.c.b16 %v1607, %v1605
        %v1628 = vpack.c.b16 %v1610, %v1608
        %v1629 = vpack.c.b16 %v1611, %v1609
        %v1630 = vpack.c.b16 %v1614, %v1612
        %v1631 = vpack.c.b16 %v1615, %v1613
        %1648 = vmatprep.subr.bf16.mxu0 %v1631
        %1649 = vmatpush1.bf16.msra.mxu0 %v1630
        %1650 = vmatprep.subr.bf16.mxu0 %v1629
        %1651 = vmatpush1.bf16.msra.mxu0 %v1628
        %1652 = vmatprep.subr.bf16.mxu0 %v1627
        %1653 = vmatpush1.bf16.msra.mxu0 %v1626
        %1654 = vmatprep.subr.bf16.mxu0 %v1625
        %1655 = vmatpush1.bf16.msra.mxu0 %v1624
        %1656 = vmatprep.subr.bf16.mxu0 %v1623
        %1657 = vmatpush1.bf16.msra.mxu0 %v1622
        %1658 = vmatprep.subr.bf16.mxu0 %v1621
        %1659 = vmatpush1.bf16.msra.mxu0 %v1620
        %1660 = vmatprep.subr.bf16.mxu0 %v1619
        %1661 = vmatpush1.bf16.msra.mxu0 %v1618
        %1662 = vmatprep.subr.bf16.mxu0 %v1617
        %1663 = vmatpush1.bf16.msra.mxu0 %v1616
        %1664 = vmatprep.subr.bf16.mxu0 0
        %1665 = vmatpush2.bf16.msra.mxu0 0
        %1666 = vmatprep.subr.bf16.mxu0 0
        %1667 = vmatpush2.bf16.msra.mxu0 0
        %1668 = vmatprep.subr.bf16.mxu0 0
        %1669 = vmatpush2.bf16.msra.mxu0 0
        %1670 = vmatprep.subr.bf16.mxu0 0
        %1671 = vmatpush2.bf16.msra.mxu0 0
        %1672 = vmatprep.subr.bf16.mxu0 0
        %1673 = vmatpush2.bf16.msra.mxu0 0
        %1674 = vmatprep.subr.bf16.mxu0 0
        %1675 = vmatpush2.bf16.msra.mxu0 0
        %1676 = vmatprep.subr.bf16.mxu0 0
        %1677 = vmatpush2.bf16.msra.mxu0 0
        %1678 = vmatprep.subr.bf16.mxu0 0
        %1679 = vmatpush2.bf16.msra.mxu0 0
        %1680 = vmatprep.mubr.bf16.mxu0 0
        %1681 = vmatmul.mubr.bf16.gmra.mxu0 %v1539
        %v1682 = vpop.f32.mrf.mxu0
        %v1683 = vadd.f32 %v1561, %v1682
        %v1684 = vpop.f32.mrf.mxu0
        %v1685 = vadd.f32 %v1565, %v1684
        %v1686 = vpop.f32.mrf.mxu0
        %v1687 = vpop.f32.mrf.mxu0
        %1688 = vdwg.mxu0
        %v1689 = vmul.f32 %v1683, %v1683
        %v1690 = vmul.f32 %v1685, %v1685
        %v1691 = vmul.f32 %v1683, %v1689
        %v1692 = vmul.f32 %v1685, %v1690
        %v1693 = vmul.f32 %v1691, 0.044715
        %v1694 = vmul.f32 %v1692, 0.044715
        %v1695 = vadd.f32 %v1683, %v1693
        %v1696 = vadd.f32 %v1685, %v1694
        %v1697 = vmul.f32 %v1695, 0.7978846
        %v1698 = vmul.f32 %v1696, 0.7978846
        %v1699 = vtanh.pop %v1697
        %v1700 = vtanh.pop %v1698
        %v1701 = vadd.f32 %v1699, 1.0
        %v1702 = vadd.f32 %v1700, 1.0
        %v1703 = vmul.f32 %v1701, 0.5
        %v1704 = vmul.f32 %v1702, 0.5
        %v1705 = vmul.f32 %v1683, %v1703
        %v1706 = vmul.f32 %v1685, %v1704
        %v1707 = vpack.c.bf16 %v1705, %v1705
        %v1708 = vpack.c.bf16 %v1706, %v1706
        %v1709 = vld [vmem:[%s554] sm:$0xf]
        %v1710 = vld [vmem:[%s554 + $0x4] sm:$0xf]
        %v1711 = vld [vmem:[%s554 + $0x8] sm:$0xf]
        %v1712 = vld [vmem:[%s554 + $0xc] sm:$0xf]
        %v1713 = vld [vmem:[%s554 + $0x10] sm:$0xf]
        %v1714 = vld [vmem:[%s554 + $0x14] sm:$0xf]
        %v1715 = vld [vmem:[%s554 + $0x18] sm:$0xf]
        %v1716 = vld [vmem:[%s554 + $0x1c] sm:$0xf]
        %v1717 = vld [vmem:[%s554 + $0x20] sm:$0xf]
        %v1718 = vld [vmem:[%s554 + $0x24] sm:$0xf]
        %v1719 = vld [vmem:[%s554 + $0x28] sm:$0xf]
        %v1720 = vld [vmem:[%s554 + $0x2c] sm:$0xf]
        %v1721 = vld [vmem:[%s554 + $0x30] sm:$0xf]
        %v1722 = vld [vmem:[%s554 + $0x34] sm:$0xf]
        %v1723 = vld [vmem:[%s554 + $0x38] sm:$0xf]
        %v1724 = vld [vmem:[%s554 + $0x3c] sm:$0xf]
        %v1725 = vld [vmem:[%s554 + $0x40] sm:$0xf]
        %v1726 = vld [vmem:[%s554 + $0x44] sm:$0xf]
        %v1727 = vld [vmem:[%s554 + $0x48] sm:$0xf]
        %v1728 = vld [vmem:[%s554 + $0x4c] sm:$0xf]
        %v1729 = vld [vmem:[%s554 + $0x50] sm:$0xf]
        %v1730 = vld [vmem:[%s554 + $0x54] sm:$0xf]
        %v1731 = vld [vmem:[%s554 + $0x58] sm:$0xf]
        %v1732 = vld [vmem:[%s554 + $0x5c] sm:$0xf]
        %v1733 = vld [vmem:[%s554 + $0x60] sm:$0xf]
        %v1734 = vld [vmem:[%s554 + $0x64] sm:$0xf]
        %v1735 = vld [vmem:[%s554 + $0x68] sm:$0xf]
        %v1736 = vld [vmem:[%s554 + $0x6c] sm:$0xf]
        %v1737 = vld [vmem:[%s554 + $0x70] sm:$0xf]
        %v1738 = vld [vmem:[%s554 + $0x74] sm:$0xf]
        %v1739 = vld [vmem:[%s554 + $0x78] sm:$0xf]
        %v1740 = vld [vmem:[%s554 + $0x7c] sm:$0xf]
        %v1741 = vlaneseq
        %v1742 = vshrl.u32 %v1741, 7
        %v1743 = vsub.s32 3, %v1742
        %v1744 = vrot.slane %v680, %v1743
        %v1777 = vunpack.c.l.b16 %v1709
        %v1778 = vunpack.c.l.b16 %v1710
        %v1779 = vunpack.c.l.b16 %v1711
        %v1780 = vunpack.c.l.b16 %v1712
        %v1781 = vunpack.c.l.b16 %v1713
        %v1782 = vunpack.c.l.b16 %v1714
        %v1783 = vunpack.c.l.b16 %v1715
        %v1784 = vunpack.c.l.b16 %v1716
        %v1785 = vunpack.c.l.b16 %v1717
        %v1786 = vunpack.c.l.b16 %v1718
        %v1787 = vunpack.c.l.b16 %v1719
        %v1788 = vunpack.c.l.b16 %v1720
        %v1789 = vunpack.c.l.b16 %v1721
        %v1790 = vunpack.c.l.b16 %v1722
        %v1791 = vunpack.c.l.b16 %v1723
        %v1792 = vunpack.c.l.b16 %v1724
        %v1793 = vunpack.c.l.b16 %v1725
        %v1794 = vunpack.c.l.b16 %v1726
        %v1795 = vunpack.c.l.b16 %v1727
        %v1796 = vunpack.c.l.b16 %v1728
        %v1797 = vunpack.c.l.b16 %v1729
        %v1798 = vunpack.c.l.b16 %v1730
        %v1799 = vunpack.c.l.b16 %v1731
        %v1800 = vunpack.c.l.b16 %v1732
        %v1801 = vunpack.c.l.b16 %v1733
        %v1802 = vunpack.c.l.b16 %v1734
        %v1803 = vunpack.c.l.b16 %v1735
        %v1804 = vunpack.c.l.b16 %v1736
        %v1805 = vunpack.c.l.b16 %v1737
        %v1806 = vunpack.c.l.b16 %v1738
        %v1807 = vunpack.c.l.b16 %v1739
        %v1808 = vunpack.c.l.b16 %v1740
        %v1809 = vpack.c.b16 %v1778, %v1777
        %v1810 = vpack.c.b16 %v1780, %v1779
        %v1811 = vpack.c.b16 %v1782, %v1781
        %v1812 = vpack.c.b16 %v1784, %v1783
        %v1813 = vpack.c.b16 %v1786, %v1785
        %v1814 = vpack.c.b16 %v1788, %v1787
        %v1815 = vpack.c.b16 %v1790, %v1789
        %v1816 = vpack.c.b16 %v1792, %v1791
        %v1817 = vpack.c.b16 %v1794, %v1793
        %v1818 = vpack.c.b16 %v1796, %v1795
        %v1819 = vpack.c.b16 %v1798, %v1797
        %v1820 = vpack.c.b16 %v1800, %v1799
        %v1821 = vpack.c.b16 %v1802, %v1801
        %v1822 = vpack.c.b16 %v1804, %v1803
        %v1823 = vpack.c.b16 %v1806, %v1805
        %v1824 = vpack.c.b16 %v1808, %v1807
        %1841 = vmatprep.subr.bf16.mxu0 0
        %1842 = vmatpush1.bf16.msra.mxu0 %v1816
        %1843 = vmatprep.subr.bf16.mxu0 0
        %1844 = vmatpush1.bf16.msra.mxu0 %v1815
        %1845 = vmatprep.subr.bf16.mxu0 0
        %1846 = vmatpush1.bf16.msra.mxu0 %v1814
        %1847 = vmatprep.subr.bf16.mxu0 0
        %1848 = vmatpush1.bf16.msra.mxu0 %v1813
        %1849 = vmatprep.subr.bf16.mxu0 0
        %1850 = vmatpush1.bf16.msra.mxu0 %v1812
        %1851 = vmatprep.subr.bf16.mxu0 0
        %1852 = vmatpush1.bf16.msra.mxu0 %v1811
        %1853 = vmatprep.subr.bf16.mxu0 0
        %1854 = vmatpush1.bf16.msra.mxu0 %v1810
        %1855 = vmatprep.subr.bf16.mxu0 0
        %1856 = vmatpush1.bf16.msra.mxu0 %v1809
        %1857 = vmatprep.subr.bf16.mxu0 0
        %1858 = vmatpush2.bf16.msra.mxu0 %v1824
        %1859 = vmatprep.subr.bf16.mxu0 0
        %1860 = vmatpush2.bf16.msra.mxu0 %v1823
        %1861 = vmatprep.subr.bf16.mxu0 0
        %1862 = vmatpush2.bf16.msra.mxu0 %v1822
        %1863 = vmatprep.subr.bf16.mxu0 0
        %1864 = vmatpush2.bf16.msra.mxu0 %v1821
        %1865 = vmatprep.subr.bf16.mxu0 0
        %1866 = vmatpush2.bf16.msra.mxu0 %v1820
        %1867 = vmatprep.subr.bf16.mxu0 0
        %1868 = vmatpush2.bf16.msra.mxu0 %v1819
        %1869 = vmatprep.subr.bf16.mxu0 0
        %1870 = vmatpush2.bf16.msra.mxu0 %v1818
        %1871 = vmatprep.subr.bf16.mxu0 0
        %1872 = vmatpush2.bf16.msra.mxu0 %v1817
        %1873 = vmatprep.mubr.bf16.mxu0 %v1708
        %1874 = vmatmul.mubr.bf16.gmra.mxu0 %v1707
        %v1875 = vpop.f32.mrf.mxu0
        %v1876 = vadd.f32 %v1744, %v1875
        %v1877 = vpop.f32.mrf.mxu0
        %v1878 = vpop.f32.mrf.mxu0
        %v1879 = vpop.f32.mrf.mxu0
        %1880 = vdwg.mxu0
        %v1881 = vadd.f32 %v1538, %v1876
        %1882 = vadd.xlane.f32.xlu0 %v1881
        %v1883 = vpop.xlane.xlu0 %1882
        %v1884 = vmul.f32 %v1883, %v1519
        %v1885 = vsub.f32 %v1881, %v1884
        %v1886 = vmul.f32 %v1885, %v1885
        %1887 = vadd.xlane.f32.xlu0 %v1886
        %v1888 = vpop.xlane.xlu0 %1887
        %v1889 = vmul.f32 %v1888, %v1519
        %v1890 = vadd.f32 %v1889, 1e-05
        %v1891 = vrsqrt.pop %v1890
        %v1892 = vmul.f32 %v1885, %v1891
        %v1893 = vlaneseq
        %v1894 = vshrl.u32 %v1893, 7
        %v1895 = vsub.s32 4, %v1894
        %v1896 = vrot.slane %v680, %v1895
        %v1897 = vmul.f32 %v1892, %v1896
        %v1898 = vlaneseq
        %v1899 = vshrl.u32 %v1898, 7
        %v1900 = vsub.s32 5, %v1899
        %v1901 = vrot.slane %v680, %v1900
        %v1902 = vadd.f32 %v1897, %v1901
        %1903 = vst [vmem:[#allocation2] sm:$0xff] %v1902
        %p1904 = scmp.eq.s32.totalorder %s40, 1
        // Predicated region
        $region93: #{tpu_custom_call.1} parent=63 // pred_check
          %p1905 = pneg %p1904
        $region94: #{tpu_custom_call.1} parent=63 // pred_check_branch
          %1907 = sbr.rel (%p1905) target = $region96
        $region95: #{tpu_custom_call.1} parent=63 // pred_region
          %v1908 = vpack.c.bf16 %v1902, %v1902
          %v1909 = vld [vmem:[#allocation12] sm:$0xf]
          %v1910 = vld [vmem:[#allocation12 + $0x4] sm:$0xf]
          %v1911 = vld [vmem:[#allocation12 + $0x8] sm:$0xf]
          %v1912 = vld [vmem:[#allocation12 + $0xc] sm:$0xf]
          %v1913 = vld [vmem:[#allocation12 + $0x10] sm:$0xf]
          %v1914 = vld [vmem:[#allocation12 + $0x14] sm:$0xf]
          %v1915 = vld [vmem:[#allocation12 + $0x18] sm:$0xf]
          %v1916 = vld [vmem:[#allocation12 + $0x1c] sm:$0xf]
          %v1917 = vld [vmem:[#allocation12 + $0x20] sm:$0xf]
          %v1918 = vld [vmem:[#allocation12 + $0x24] sm:$0xf]
          %v1919 = vld [vmem:[#allocation12 + $0x28] sm:$0xf]
          %v1920 = vld [vmem:[#allocation12 + $0x2c] sm:$0xf]
          %v1921 = vld [vmem:[#allocation12 + $0x30] sm:$0xf]
          %v1922 = vld [vmem:[#allocation12 + $0x34] sm:$0xf]
          %v1923 = vld [vmem:[#allocation12 + $0x38] sm:$0xf]
          %v1924 = vld [vmem:[#allocation12 + $0x3c] sm:$0xf]
          %v1925 = vld [vmem:[%s2 + $0x2] sm:$0x1]
          %v1942 = vunpack.c.l.b16 %v1909
          %v1943 = vunpack.c.l.b16 %v1910
          %v1944 = vunpack.c.l.b16 %v1911
          %v1945 = vunpack.c.l.b16 %v1912
          %v1946 = vunpack.c.l.b16 %v1913
          %v1947 = vunpack.c.l.b16 %v1914
          %v1948 = vunpack.c.l.b16 %v1915
          %v1949 = vunpack.c.l.b16 %v1916
          %v1950 = vunpack.c.l.b16 %v1917
          %v1951 = vunpack.c.l.b16 %v1918
          %v1952 = vunpack.c.l.b16 %v1919
          %v1953 = vunpack.c.l.b16 %v1920
          %v1954 = vunpack.c.l.b16 %v1921
          %v1955 = vunpack.c.l.b16 %v1922
          %v1956 = vunpack.c.l.b16 %v1923
          %v1957 = vunpack.c.l.b16 %v1924
          %v1958 = vpack.c.b16 %v1943, %v1942
          %v1959 = vpack.c.b16 %v1945, %v1944
          %v1960 = vpack.c.b16 %v1947, %v1946
          %v1961 = vpack.c.b16 %v1949, %v1948
          %v1962 = vpack.c.b16 %v1951, %v1950
          %v1963 = vpack.c.b16 %v1953, %v1952
          %v1964 = vpack.c.b16 %v1955, %v1954
          %v1965 = vpack.c.b16 %v1957, %v1956
          %1974 = vmatprep.subr.bf16.mxu0 0
          %1975 = vmatpush1.bf16.msra.mxu0 %v1965
          %1976 = vmatprep.subr.bf16.mxu0 0
          %1977 = vmatpush1.bf16.msra.mxu0 %v1964
          %1978 = vmatprep.subr.bf16.mxu0 0
          %1979 = vmatpush1.bf16.msra.mxu0 %v1963
          %1980 = vmatprep.subr.bf16.mxu0 0
          %1981 = vmatpush1.bf16.msra.mxu0 %v1962
          %1982 = vmatprep.subr.bf16.mxu0 0
          %1983 = vmatpush1.bf16.msra.mxu0 %v1961
          %1984 = vmatprep.subr.bf16.mxu0 0
          %1985 = vmatpush1.bf16.msra.mxu0 %v1960
          %1986 = vmatprep.subr.bf16.mxu0 0
          %1987 = vmatpush1.bf16.msra.mxu0 %v1959
          %1988 = vmatprep.subr.bf16.mxu0 0
          %1989 = vmatpush1.bf16.msra.mxu0 %v1958
          %1990 = vmatprep.subr.bf16.mxu0 0
          %1991 = vmatpush2.bf16.msra.mxu0 0
          %1992 = vmatprep.subr.bf16.mxu0 0
          %1993 = vmatpush2.bf16.msra.mxu0 0
          %1994 = vmatprep.subr.bf16.mxu0 0
          %1995 = vmatpush2.bf16.msra.mxu0 0
          %1996 = vmatprep.subr.bf16.mxu0 0
          %1997 = vmatpush2.bf16.msra.mxu0 0
          %1998 = vmatprep.subr.bf16.mxu0 0
          %1999 = vmatpush2.bf16.msra.mxu0 0
          %2000 = vmatprep.subr.bf16.mxu0 0
          %2001 = vmatpush2.bf16.msra.mxu0 0
          %2002 = vmatprep.subr.bf16.mxu0 0
          %2003 = vmatpush2.bf16.msra.mxu0 0
          %2004 = vmatprep.subr.bf16.mxu0 0
          %2005 = vmatpush2.bf16.msra.mxu0 0
          %2006 = vmatprep.mubr.bf16.mxu0 0
          %2007 = vmatmul.mubr.bf16.gmra.mxu0 %v1908
          %v2008 = vpop.f32.mrf.mxu0
          %v2009 = vadd.f32 %v1925, %v2008
          %v2010 = vpop.f32.mrf.mxu0
          %v2011 = vpop.f32.mrf.mxu0
          %v2012 = vpop.f32.mrf.mxu0
          %2013 = vdwg.mxu0
          %v2014 = vtanh.pop %v2009
          %2015 = vst [vmem:[%s630] sm:$0x1] %v2014
        $region96: #{tpu_custom_call.1} parent=63 // pred_fallthru
          _
        %s2016 = sand.u32 %s331, 1
        %s2017 = scalar_lea.sflag [#allocation5], %s2016
        %s2018 = sand.u32 %s331, 1
        %s2019 = scalar_lea.vmem [#allocation14], %s2018
        // Predicated region
        $region97: #{tpu_custom_call.1} parent=63 // pred_check
          %p2020 = pneg %p341
        $region98: #{tpu_custom_call.1} parent=63 // pred_check_branch
          %2022 = sbr.rel (%p2020) target = $region100
        $region99: #{tpu_custom_call.1} parent=63 // pred_region
          %s2024 = ssub.s32 16, 16
          %2025 = vsyncadd %s2017, %s2024
          %s2026 = smul.addr %s39, 16
          %s2027 = scalar_lea.hbm %s11, %s2026
          %s2029 = sshll.u32 %s2019, 4
          %s2030 = int_to_ptr.vmem [resolvable:$true] %s2029
          %2032 = dma.vmem_to_hbm [thread:$0]  %s2030, 16, %s2027, %s2017
        $region100: #{tpu_custom_call.1} parent=63 // pred_fallthru
          _
      $region64: #{tpu_custom_call.1} parent=5 // pred_fallthru
        _
      %p2033 = scmp.le.s32.totalorder 2, %s30
      // Predicated region
      $region101: #{tpu_custom_call.1} parent=5 // pred_check
        %p2034 = pneg %p2033
      $region102: #{tpu_custom_call.1} parent=5 // pred_check_branch
        %2036 = sbr.rel (%p2034) target = $region104
      $region103: #{tpu_custom_call.1} parent=5 // pred_region
        %s2037 = ssub.s32 %s30, 2
        // Predicated region
        $region105: #{tpu_custom_call.1} parent=103 // pred_check
          %p2038 = pneg %p347
        $region106: #{tpu_custom_call.1} parent=103 // pred_check_branch
          %2040 = sbr.rel (%p2038) target = $region108
        $region107: #{tpu_custom_call.1} parent=103 // pred_region
          %s2041 = sand.u32 %s332, 1
          %s2042 = scalar_lea.sflag [#allocation5], %s2041
          %s2043 = sand.u32 %s332, 1
          %s2044 = scalar_lea.vmem [#allocation14], %s2043
          %2045 = dma.done %s2042, 16
        $region108: #{tpu_custom_call.1} parent=103 // pred_fallthru
          _
      $region104: #{tpu_custom_call.1} parent=5 // pred_fallthru
        _
    $region6: #{tpu_custom_call.1} parent=1 // loop_footer
      %s34 = sadd.s32 1, %s30
    $region7: #{tpu_custom_call.1} parent=1 // loop_footer_branch
      %29 = sbr.rel target = $region3
    $region8: #{tpu_custom_call.1} parent=1 // loop_exit
      _
    %2046 = vsyncpa [#allocation4], 1
    %s2047 = scalar_lea.sflag [#allocation4], 1
    %2048 = vsyncpa %s2047, 1
    %2049 = vsyncpa [#allocation7], 1
    %s2050 = scalar_lea.sflag [#allocation7], 1
    %2051 = vsyncpa %s2050, 1
    %2052 = vsyncpa [#allocation10], 1
    %s2053 = scalar_lea.sflag [#allocation10], 1
    %2054 = vsyncpa %s2053, 1
    %2055 = vsyncpa [#allocation13], 1
    %2056 = vsyncpa [#allocation5], 1
    %s2057 = scalar_lea.sflag [#allocation5], 1
    %2058 = vsyncpa %s2057, 1

</llo_original>
